<compile_context>
chip_gen: v6e
topology: v6e:2x2x1
jax: 0.10.0
libtpu: 0.0.40
codegen_flags: <defaults>
</compile_context>

<pallas_src>
import jax
import jax.numpy as jnp
from jax.experimental import pallas as pl
from jax.experimental.pallas import tpu as pltpu

NUM_FEATURES = 784
NUM_HIDDEN_1 = 128
NUM_HIDDEN_2 = 256
NUM_CLASSES = 10

# Lane-aligned padded sizes.
PADDED_FEATURES = 896          # 7 * 128 (784 zero-padded up)
PADDED_CLASSES = 128           # 10 -> 128 so output stores are unmasked
NEG_BIG = -1e30                # bias for padded class columns (exp underflows to 0)


def ffnn_kernel(x_ref, w1_ref, b1_ref, w2_ref, b2_ref, w3_ref, b3_ref,
                logits_ref, logprobs_ref):
    # All three matmuls: bf16 inputs, f32 accumulation (MXU-native).
    h1 = jnp.dot(x_ref[...], w1_ref[...], preferred_element_type=jnp.float32)
    h1 = jnp.maximum(h1 + b1_ref[...], 0.0)
    h2 = jnp.dot(h1.astype(jnp.bfloat16), w2_ref[...],
                 preferred_element_type=jnp.float32)
    h2 = jnp.maximum(h2 + b2_ref[...], 0.0)
    logits = jnp.dot(h2.astype(jnp.bfloat16), w3_ref[...],
                     preferred_element_type=jnp.float32)
    logits = logits + b3_ref[...]        # padded class lanes carry a -1e30 bias
    logits_ref[...] = logits
    # Stable log_softmax over the class lanes; padded lanes are ~-1e30 so they
    # never win the max and their exp() underflows to exactly 0 in the sum.
    m = jnp.max(logits, axis=-1, keepdims=True)
    shifted = logits - m
    lse = jnp.log(jnp.sum(jnp.exp(shifted), axis=-1, keepdims=True))
    logprobs_ref[...] = shifted - lse


def _default_batch_tile(padded_batch):
    # Prefer 128-512 row tiles (multiples of 16 for bf16 sublane packing) with
    # >=2 grid steps so a v7x megacore can split the batch across both TCs.
    for tb in (512, 256, 128, 64, 32, 16):
        if padded_batch % tb == 0 and padded_batch // tb >= 2:
            return tb
    return padded_batch


def ff_nn_forward(x, params, *, batch_tile=None):
    """x: [B, NUM_FEATURES] float32. Returns (logits, log_probs), each [B, 10] f32."""
    w1, b1, w2, b2, w3, b3 = params
    B = x.shape[0]

    # Pad batch to a multiple of 16 and pick a batch tile.
    Bp = ((B + 15) // 16) * 16
    tb = batch_tile if batch_tile is not None else _default_batch_tile(Bp)
    assert tb % 8 == 0, "batch_tile must be a multiple of 8"
    Bp = ((Bp + tb - 1) // tb) * tb
    grid = (Bp // tb,)

    # Lane-align x / weights (zero padding does not change the math) and cast
    # the matmul operands to bf16; biases stay f32.
    xp = jnp.pad(x, ((0, Bp - B), (0, PADDED_FEATURES - NUM_FEATURES))
                 ).astype(jnp.bfloat16)
    w1p = jnp.pad(w1, ((0, PADDED_FEATURES - NUM_FEATURES), (0, 0))
                  ).astype(jnp.bfloat16)
    w2c = w2.astype(jnp.bfloat16)
    w3p = jnp.pad(w3, ((0, 0), (0, PADDED_CLASSES - NUM_CLASSES))
                  ).astype(jnp.bfloat16)
    b3p = jnp.full((1, PADDED_CLASSES), NEG_BIG, jnp.float32)
    b3p = b3p.at[:, :NUM_CLASSES].set(b3)

    in_specs = [
        pl.BlockSpec((tb, PADDED_FEATURES), lambda i: (i, 0)),
        pl.BlockSpec((PADDED_FEATURES, NUM_HIDDEN_1), lambda i: (0, 0)),
        pl.BlockSpec((1, NUM_HIDDEN_1), lambda i: (0, 0)),
        pl.BlockSpec((NUM_HIDDEN_1, NUM_HIDDEN_2), lambda i: (0, 0)),
        pl.BlockSpec((1, NUM_HIDDEN_2), lambda i: (0, 0)),
        pl.BlockSpec((NUM_HIDDEN_2, PADDED_CLASSES), lambda i: (0, 0)),
        pl.BlockSpec((1, PADDED_CLASSES), lambda i: (0, 0)),
    ]
    out_specs = [
        pl.BlockSpec((tb, PADDED_CLASSES), lambda i: (i, 0)),
        pl.BlockSpec((tb, PADDED_CLASSES), lambda i: (i, 0)),
    ]
    out_shape = [
        jax.ShapeDtypeStruct((Bp, PADDED_CLASSES), jnp.float32),
        jax.ShapeDtypeStruct((Bp, PADDED_CLASSES), jnp.float32),
    ]

    # NOTE: with bf16 operands the per-step VMEM footprint is small
    # (x tile <= 1 MiB, weights ~0.35 MiB double-buffered), so the default
    # scoped VMEM limit is fine on v5e/v6e/v7x; no vmem_limit_bytes needed.
    logits, logprobs = pl.pallas_call(
        ffnn_kernel,
        grid_spec=pltpu.PrefetchScalarGridSpec(
            num_scalar_prefetch=0,
            grid=grid,
            in_specs=in_specs,
            out_specs=out_specs,
        ),
        out_shape=out_shape,
        compiler_params=pltpu.CompilerParams(
            dimension_semantics=("parallel",)),
    )(xp, w1p, b1, w2c, b2, w3p, b3p)

    return logits[:B, :NUM_CLASSES], logprobs[:B, :NUM_CLASSES]


def init_params(key):
    """Matches FF_NN.__init__: weights ~ N(0, 0.1), biases zero.
    Weights are stored transposed ([in, out]) for x @ W in the kernel."""
    k1, k2, k3 = jax.random.split(key, 3)
    w1 = (0.1 * jax.random.normal(k1, (NUM_FEATURES, NUM_HIDDEN_1))).astype(jnp.float32)
    b1 = jnp.zeros((1, NUM_HIDDEN_1), jnp.float32)
    w2 = (0.1 * jax.random.normal(k2, (NUM_HIDDEN_1, NUM_HIDDEN_2))).astype(jnp.float32)
    b2 = jnp.zeros((1, NUM_HIDDEN_2), jnp.float32)
    w3 = (0.1 * jax.random.normal(k3, (NUM_HIDDEN_2, NUM_CLASSES))).astype(jnp.float32)
    b3 = jnp.zeros((1, NUM_CLASSES), jnp.float32)
    return (w1, b1, w2, b2, w3, b3)


def reference_forward(x, params):
    """Reference matching the kernel's numerics: bf16 matmul operands,
    f32 accumulation, f32 bias/relu/log_softmax."""
    w1, b1, w2, b2, w3, b3 = params

    def mm(a, w):
        return jnp.dot(a.astype(jnp.bfloat16), w.astype(jnp.bfloat16),
                       preferred_element_type=jnp.float32)

    h1 = jnp.maximum(mm(x, w1) + b1, 0.0)
    h2 = jnp.maximum(mm(h1, w2) + b2, 0.0)
    logits = mm(h2, w3) + b3
    logprobs = jax.nn.log_softmax(logits, axis=1)
    return logits, logprobs


if __name__ == "__main__":
    key = jax.random.PRNGKey(0)
    kx, kp = jax.random.split(key)
    B = 256  # small test batch; default tiling gives 2 grid steps of 128 rows
    x = jax.random.normal(kx, (B, NUM_FEATURES), dtype=jnp.float32)
    params = init_params(kp)

    logits, logprobs = ff_nn_forward(x, params)
    jax.block_until_ready((logits, logprobs))

    ref_logits, ref_logprobs = reference_forward(x, params)
    assert logits.shape == (B, NUM_CLASSES)
    assert logprobs.shape == (B, NUM_CLASSES)
    assert jnp.allclose(logits, ref_logits, atol=2e-2, rtol=2e-2)
    assert jnp.allclose(logprobs, ref_logprobs, atol=2e-2, rtol=2e-2)
    print("KERNEL_OK")
</pallas_src>

<mosaic_0001>
module attributes {stable_mosaic.version = 11 : i64} {
  func.func @ffnn_kernel(%arg0: i32, %arg1: memref<128x896xbf16, #tpu.memory_space<vmem>>, %arg2: memref<896x128xbf16, #tpu.memory_space<vmem>>, %arg3: memref<1x128xf32, #tpu.memory_space<vmem>>, %arg4: memref<128x256xbf16, #tpu.memory_space<vmem>>, %arg5: memref<1x256xf32, #tpu.memory_space<vmem>>, %arg6: memref<256x128xbf16, #tpu.memory_space<vmem>>, %arg7: memref<1x128xf32, #tpu.memory_space<vmem>>, %arg8: memref<128x128xf32, #tpu.memory_space<vmem>>, %arg9: memref<128x128xf32, #tpu.memory_space<vmem>>) attributes {dimension_semantics = [#tpu.dimension_semantics<parallel>], iteration_bounds = array<i64: 2>, scalar_prefetch = 0 : i64, scratch_operands = 0 : i64, tpu.core_type = #tpu.core_type<tc>, window_params = [{transform_indices = @transform_0, window_bounds = array<i64: 128, 896>}, {pipeline_mode = #tpu.pipeline_mode<synchronous>, transform_indices = @transform_1, window_bounds = array<i64: 896, 128>}, {pipeline_mode = #tpu.pipeline_mode<synchronous>, transform_indices = @transform_2, window_bounds = array<i64: 1, 128>}, {pipeline_mode = #tpu.pipeline_mode<synchronous>, transform_indices = @transform_3, window_bounds = array<i64: 128, 256>}, {pipeline_mode = #tpu.pipeline_mode<synchronous>, transform_indices = @transform_4, window_bounds = array<i64: 1, 256>}, {pipeline_mode = #tpu.pipeline_mode<synchronous>, transform_indices = @transform_5, window_bounds = array<i64: 256, 128>}, {pipeline_mode = #tpu.pipeline_mode<synchronous>, transform_indices = @transform_6, window_bounds = array<i64: 1, 128>}, {transform_indices = @transform_7, window_bounds = array<i64: 128, 128>}, {transform_indices = @transform_8, window_bounds = array<i64: 128, 128>}]} {
    %c0 = arith.constant 0 : index
    %c0_0 = arith.constant 0 : index
    %0 = vector.load %arg1[%c0, %c0_0] : memref<128x896xbf16, #tpu.memory_space<vmem>>, vector<128x896xbf16>
    %c0_1 = arith.constant 0 : index
    %c0_2 = arith.constant 0 : index
    %1 = vector.load %arg2[%c0_1, %c0_2] : memref<896x128xbf16, #tpu.memory_space<vmem>>, vector<896x128xbf16>
    %cst = arith.constant dense<0.000000e+00> : vector<128x128xf32>
    %2 = tpu.matmul %0, %1, %cst {dimension_numbers = #tpu.dot_dimension_numbers<[1], [0], [0], [1], [0, 0, 1, 1], [], []>} : vector<128x896xbf16>, vector<896x128xbf16>, vector<128x128xf32> -> vector<128x128xf32>
    %c0_3 = arith.constant 0 : index
    %c0_4 = arith.constant 0 : index
    %3 = vector.load %arg3[%c0_3, %c0_4] : memref<1x128xf32, #tpu.memory_space<vmem>>, vector<1x128xf32>
    %4 = vector.broadcast %3 : vector<1x128xf32> to vector<128x128xf32>
    %5 = arith.addf %2, %4 : vector<128x128xf32>
    %cst_5 = arith.constant 0.000000e+00 : f32
    %6 = vector.broadcast %cst_5 : f32 to vector<128x128xf32>
    %7 = arith.maximumf %5, %6 : vector<128x128xf32>
    %8 = arith.truncf %7 : vector<128x128xf32> to vector<128x128xbf16>
    %c0_6 = arith.constant 0 : index
    %c0_7 = arith.constant 0 : index
    %9 = vector.load %arg4[%c0_6, %c0_7] : memref<128x256xbf16, #tpu.memory_space<vmem>>, vector<128x256xbf16>
    %cst_8 = arith.constant dense<0.000000e+00> : vector<128x256xf32>
    %10 = tpu.matmul %8, %9, %cst_8 {dimension_numbers = #tpu.dot_dimension_numbers<[1], [0], [0], [1], [0, 0, 1, 1], [], []>} : vector<128x128xbf16>, vector<128x256xbf16>, vector<128x256xf32> -> vector<128x256xf32>
    %c0_9 = arith.constant 0 : index
    %c0_10 = arith.constant 0 : index
    %11 = vector.load %arg5[%c0_9, %c0_10] : memref<1x256xf32, #tpu.memory_space<vmem>>, vector<1x256xf32>
    %12 = vector.broadcast %11 : vector<1x256xf32> to vector<128x256xf32>
    %13 = arith.addf %10, %12 : vector<128x256xf32>
    %cst_11 = arith.constant 0.000000e+00 : f32
    %14 = vector.broadcast %cst_11 : f32 to vector<128x256xf32>
    %15 = arith.maximumf %13, %14 : vector<128x256xf32>
    %16 = arith.truncf %15 : vector<128x256xf32> to vector<128x256xbf16>
    %c0_12 = arith.constant 0 : index
    %c0_13 = arith.constant 0 : index
    %17 = vector.load %arg6[%c0_12, %c0_13] : memref<256x128xbf16, #tpu.memory_space<vmem>>, vector<256x128xbf16>
    %cst_14 = arith.constant dense<0.000000e+00> : vector<128x128xf32>
    %18 = tpu.matmul %16, %17, %cst_14 {dimension_numbers = #tpu.dot_dimension_numbers<[1], [0], [0], [1], [0, 0, 1, 1], [], []>} : vector<128x256xbf16>, vector<256x128xbf16>, vector<128x128xf32> -> vector<128x128xf32>
    %c0_15 = arith.constant 0 : index
    %c0_16 = arith.constant 0 : index
    %19 = vector.load %arg7[%c0_15, %c0_16] : memref<1x128xf32, #tpu.memory_space<vmem>>, vector<1x128xf32>
    %20 = vector.broadcast %19 : vector<1x128xf32> to vector<128x128xf32>
    %21 = arith.addf %18, %20 : vector<128x128xf32>
    %c0_17 = arith.constant 0 : index
    %c0_18 = arith.constant 0 : index
    %22 = vector.load %arg8[%c0_17, %c0_18] : memref<128x128xf32, #tpu.memory_space<vmem>>, vector<128x128xf32>
    tpu.vector_store %arg8[%c0_17, %c0_18], %21 {strides = array<i32>} : memref<128x128xf32, #tpu.memory_space<vmem>>, vector<128x128xf32>,
    %cst_19 = arith.constant dense<0xFF800000> : vector<128xf32>
    %23 = vector.multi_reduction <maximumf>, %21, %cst_19 [1] : vector<128x128xf32> to vector<128xf32>
    %24 = vector.shape_cast %23 : vector<128xf32> to vector<128x1xf32>
    %25 = vector.broadcast %24 : vector<128x1xf32> to vector<128x128xf32>
    %26 = arith.subf %21, %25 : vector<128x128xf32>
    %27 = math.exp %26 : vector<128x128xf32>
    %cst_20 = arith.constant dense<0.000000e+00> : vector<128xf32>
    %28 = vector.multi_reduction <add>, %27, %cst_20 [1] : vector<128x128xf32> to vector<128xf32>
    %29 = vector.shape_cast %28 : vector<128xf32> to vector<128x1xf32>
    %30 = math.log %29 : vector<128x1xf32>
    %31 = vector.broadcast %30 : vector<128x1xf32> to vector<128x128xf32>
    %32 = arith.subf %26, %31 : vector<128x128xf32>
    %c0_21 = arith.constant 0 : index
    %c0_22 = arith.constant 0 : index
    %33 = vector.load %arg9[%c0_21, %c0_22] : memref<128x128xf32, #tpu.memory_space<vmem>>, vector<128x128xf32>
    tpu.vector_store %arg9[%c0_21, %c0_22], %32 {strides = array<i32>} : memref<128x128xf32, #tpu.memory_space<vmem>>, vector<128x128xf32>,
    return
  }
  func.func @transform_0(%arg0: i32) -> (i32, i32) {
    %c0_i32 = arith.constant 0 : i32
    %c0_i32_0 = arith.constant 0 : i32
    return %arg0, %c0_i32 : i32, i32
  }
  func.func @transform_1(%arg0: i32) -> (i32, i32) {
    %c0_i32 = arith.constant 0 : i32
    %c0_i32_0 = arith.constant 0 : i32
    %c0_i32_1 = arith.constant 0 : i32
    return %c0_i32, %c0_i32_0 : i32, i32
  }
  func.func @transform_2(%arg0: i32) -> (i32, i32) {
    %c0_i32 = arith.constant 0 : i32
    %c0_i32_0 = arith.constant 0 : i32
    %c0_i32_1 = arith.constant 0 : i32
    return %c0_i32, %c0_i32_0 : i32, i32
  }
  func.func @transform_3(%arg0: i32) -> (i32, i32) {
    %c0_i32 = arith.constant 0 : i32
    %c0_i32_0 = arith.constant 0 : i32
    %c0_i32_1 = arith.constant 0 : i32
    return %c0_i32, %c0_i32_0 : i32, i32
  }
  func.func @transform_4(%arg0: i32) -> (i32, i32) {
    %c0_i32 = arith.constant 0 : i32
    %c0_i32_0 = arith.constant 0 : i32
    %c0_i32_1 = arith.constant 0 : i32
    return %c0_i32, %c0_i32_0 : i32, i32
  }
  func.func @transform_5(%arg0: i32) -> (i32, i32) {
    %c0_i32 = arith.constant 0 : i32
    %c0_i32_0 = arith.constant 0 : i32
    %c0_i32_1 = arith.constant 0 : i32
    return %c0_i32, %c0_i32_0 : i32, i32
  }
  func.func @transform_6(%arg0: i32) -> (i32, i32) {
    %c0_i32 = arith.constant 0 : i32
    %c0_i32_0 = arith.constant 0 : i32
    %c0_i32_1 = arith.constant 0 : i32
    return %c0_i32, %c0_i32_0 : i32, i32
  }
  func.func @transform_7(%arg0: i32) -> (i32, i32) {
    %c0_i32 = arith.constant 0 : i32
    %c0_i32_0 = arith.constant 0 : i32
    return %arg0, %c0_i32 : i32, i32
  }
  func.func @transform_8(%arg0: i32) -> (i32, i32) {
    %c0_i32 = arith.constant 0 : i32
    %c0_i32_0 = arith.constant 0 : i32
    return %arg0, %c0_i32 : i32, i32
  }
}

</mosaic_0001>

<llo_original>
// kernel: tpu_custom_call.1
$region0: #{tpu_custom_call.1}
  #allocation0 [shape = 'u32[]', space=smem, size = 0x4, offset = 0x4, fixed_abs, tag = 'smem constant byte address 0x4 - core index']
  #allocation1 [shape = 'u32[144,128]{1,0:T(1,128)}', space=vmem, size = 0x12000, scoped, tag = 'internal scratch']
  %s0 = inlined_call_operand.hbm [shape: bf16[256,896], index: 0, kind: input, shape index: {}]
  %s1 = inlined_call_operand.hbm [shape: bf16[896,128], index: 1, kind: input, shape index: {}]
  %s2 = inlined_call_operand.vmem [shape: f32[1,128], index: 2, kind: input, shape index: {}]
  %s3 = inlined_call_operand.hbm [shape: bf16[128,256], index: 3, kind: input, shape index: {}]
  %s4 = inlined_call_operand.vmem [shape: f32[1,256], index: 4, kind: input, shape index: {}]
  %s5 = inlined_call_operand.hbm [shape: bf16[256,128], index: 5, kind: input, shape index: {}]
  %s6 = inlined_call_operand.vmem [shape: f32[1,128], index: 6, kind: input, shape index: {}]
  %s7 = inlined_call_operand.hbm [shape: f32[256,128], index: 7, kind: output, shape index: {0}]
  %s8 = inlined_call_operand.hbm [shape: f32[256,128], index: 8, kind: output, shape index: {1}]
  %9 = xla_tuple %s7, %s8
  %s10 = sld [smem:[#allocation0]]
  $region85: #{tpu_custom_call.1} parent=0
    _
  %s12 = ssub.s32 1, %s10
  %s13 = scalar_select 0, %s12, %s10
  $region1: #{tpu_custom_call.1} parent=0
    #allocation2 [shape = 'u8[458752]{0}', space=vmem, size = 0x70000, scoped, tag = 'input window, operand 0']
    #allocation3 [shape = 's32[2]{0}', space=sflag, size = 0x8, scoped, tag = 'scoped memory for tpu_custom_call.1']
    #allocation4 [shape = 's32[2]{0}', space=sflag, size = 0x8, scoped, tag = 'scoped memory for tpu_custom_call.1']
    #allocation5 [shape = 'u8[229376]{0}', space=vmem, size = 0x38000, scoped, tag = 'input window, operand 1, single buffered']
    #allocation6 [shape = 's32[1]{0}', space=sflag, size = 0x4, scoped, tag = 'scoped memory for tpu_custom_call.1']
    #allocation7 [shape = 'u8[65536]{0}', space=vmem, size = 0x10000, scoped, tag = 'input window, operand 3, single buffered']
    #allocation8 [shape = 'u8[65536]{0}', space=vmem, size = 0x10000, scoped, tag = 'input window, operand 5, single buffered']
    #allocation9 [shape = 's32[1]{0}', space=sflag, size = 0x4, scoped, tag = 'scoped memory for tpu_custom_call.1']
    #allocation10 [shape = 'u8[131072]{0}', space=vmem, size = 0x20000, scoped, tag = 'output window, operand 0']
    #allocation11 [shape = 'u8[131072]{0}', space=vmem, size = 0x20000, scoped, tag = 'output window, operand 1']
    #allocation12 [shape = 's32[2]{0}', space=sflag, size = 0x8, scoped, tag = 'scoped memory for tpu_custom_call.1']
    %14 = vsyncpa [#allocation3], 0
    %s15 = scalar_lea.sflag [#allocation3], 1
    %16 = vsyncpa %s15, 0
    %17 = vsyncpa [#allocation6], 0
    %18 = vsyncpa [#allocation9], 0
    %19 = vsyncpa [#allocation4], 0
    %s20 = scalar_lea.sflag [#allocation4], 1
    %21 = vsyncpa %s20, 0
    %22 = vsyncpa [#allocation12], 0
    %s23 = scalar_lea.sflag [#allocation12], 1
    %24 = vsyncpa %s23, 0
    loop: start=0, step=1, limit=4
    $region2: #{tpu_custom_call.1} parent=1 // loop_pre_header
      _
    $region3: #{tpu_custom_call.1} parent=1 // loop_header
      %s26 = sphi 0, %s30
      %p27 = scmp.ge.s32.totalorder %s26, 4
      %s36 = sphi 0, %s38
      %s39 = sphi 0, %s36
      %s40 = sphi 0, %s39
      %s56 = sphi 0, %s40
      %s60 = sphi 0, %s60
      %s62 = sphi 0, %s60
      %s63 = sphi 0, %s62
      %s77 = sphi 0, %s63
      %s81 = sphi 0, %s81
      %s83 = sphi 0, %s81
      %s84 = sphi 0, %s83
      %s98 = sphi 0, %s84
      %s102 = sphi 0, %s102
      %s104 = sphi 0, %s102
      %s105 = sphi 0, %s104
      %s119 = sphi 0, %s105
      %s123 = sphi 0, %s123
      %s125 = sphi 0, %s123
      %s126 = sphi 0, %s125
      %s140 = sphi 0, %s126
      %s144 = sphi 0, %s144
      %s146 = sphi 0, %s144
      %s147 = sphi 0, %s146
      %s161 = sphi 0, %s147
      %s165 = sphi 0, %s165
      %s167 = sphi 0, %s165
      %s168 = sphi 0, %s167
      %s182 = sphi 0, %s168
      %s188 = sphi 0, %s190
      %s191 = sphi 0, %s188
      %s192 = sphi 0, %s191
      %s208 = sphi 0, %s192
      %s214 = sphi 0, %s216
      %s217 = sphi 0, %s214
      %s218 = sphi 0, %s217
      %s234 = sphi 0, %s218
    $region4: #{tpu_custom_call.1} parent=1 // loop_header_branch
      %29 = sbr.rel (%p27) target = $region8
    $region5: #{tpu_custom_call.1} parent=1 // loop_body
      %s31 = ssub.s32 %s26, 1
      %s32 = ssub.s32 %s26, 2
      %s33 = sadd.s32 %s26, 1
      %s34 = ssub.s32 %s26, %s33
      %p35 = scmp.eq.s32.totalorder %s34, 0
      %s37 = sadd.s32 %s36, 1
      %s38 = scalar_select %p35, %s36, %s37
      %p41 = pneg %p35
      %p42 = scmp.eq.s32.totalorder %s26, 1
      %p43 = por %p41, %p42
      %p44 = scmp.ne.s32.totalorder %s36, %s39
      %p45 = scmp.eq.s32.totalorder %s26, 0
      %p46 = por %p44, %p45
      %p47 = scmp.ne.s32.totalorder %s36, %s39
      %p48 = scmp.eq.s32.totalorder %s31, 1
      %p49 = por %p47, %p48
      %p50 = scmp.ne.s32.totalorder %s39, %s40
      %p51 = scmp.eq.s32.totalorder %s31, 0
      %p52 = por %p50, %p51
      %p53 = scmp.ne.s32.totalorder %s39, %s40
      %p54 = scmp.eq.s32.totalorder %s32, 1
      %p55 = por %p53, %p54
      %p57 = scmp.ne.s32.totalorder %s40, %s56
      %p58 = scmp.eq.s32.totalorder %s32, 0
      %p59 = por %p57, %p58
      %s61 = sadd.s32 %s60, 1
      %p64 = scmp.eq.s32.totalorder %s26, 1
      %p65 = scmp.ne.s32.totalorder %s60, %s62
      %p66 = scmp.eq.s32.totalorder %s26, 0
      %p67 = por %p65, %p66
      %p68 = scmp.ne.s32.totalorder %s60, %s62
      %p69 = scmp.eq.s32.totalorder %s31, 1
      %p70 = por %p68, %p69
      %p71 = scmp.ne.s32.totalorder %s62, %s63
      %p72 = scmp.eq.s32.totalorder %s31, 0
      %p73 = por %p71, %p72
      %p74 = scmp.ne.s32.totalorder %s62, %s63
      %p75 = scmp.eq.s32.totalorder %s32, 1
      %p76 = por %p74, %p75
      %p78 = scmp.ne.s32.totalorder %s63, %s77
      %p79 = scmp.eq.s32.totalorder %s32, 0
      %p80 = por %p78, %p79
      %s82 = sadd.s32 %s81, 1
      %p85 = scmp.eq.s32.totalorder %s26, 1
      %p86 = scmp.ne.s32.totalorder %s81, %s83
      %p87 = scmp.eq.s32.totalorder %s26, 0
      %p88 = por %p86, %p87
      %p89 = scmp.ne.s32.totalorder %s81, %s83
      %p90 = scmp.eq.s32.totalorder %s31, 1
      %p91 = por %p89, %p90
      %p92 = scmp.ne.s32.totalorder %s83, %s84
      %p93 = scmp.eq.s32.totalorder %s31, 0
      %p94 = por %p92, %p93
      %p95 = scmp.ne.s32.totalorder %s83, %s84
      %p96 = scmp.eq.s32.totalorder %s32, 1
      %p97 = por %p95, %p96
      %p99 = scmp.ne.s32.totalorder %s84, %s98
      %p100 = scmp.eq.s32.totalorder %s32, 0
      %p101 = por %p99, %p100
      %s103 = sadd.s32 %s102, 1
      %p106 = scmp.eq.s32.totalorder %s26, 1
      %p107 = scmp.ne.s32.totalorder %s102, %s104
      %p108 = scmp.eq.s32.totalorder %s26, 0
      %p109 = por %p107, %p108
      %p110 = scmp.ne.s32.totalorder %s102, %s104
      %p111 = scmp.eq.s32.totalorder %s31, 1
      %p112 = por %p110, %p111
      %p113 = scmp.ne.s32.totalorder %s104, %s105
      %p114 = scmp.eq.s32.totalorder %s31, 0
      %p115 = por %p113, %p114
      %p116 = scmp.ne.s32.totalorder %s104, %s105
      %p117 = scmp.eq.s32.totalorder %s32, 1
      %p118 = por %p116, %p117
      %p120 = scmp.ne.s32.totalorder %s105, %s119
      %p121 = scmp.eq.s32.totalorder %s32, 0
      %p122 = por %p120, %p121
      %s124 = sadd.s32 %s123, 1
      %p127 = scmp.eq.s32.totalorder %s26, 1
      %p128 = scmp.ne.s32.totalorder %s123, %s125
      %p129 = scmp.eq.s32.totalorder %s26, 0
      %p130 = por %p128, %p129
      %p131 = scmp.ne.s32.totalorder %s123, %s125
      %p132 = scmp.eq.s32.totalorder %s31, 1
      %p133 = por %p131, %p132
      %p134 = scmp.ne.s32.totalorder %s125, %s126
      %p135 = scmp.eq.s32.totalorder %s31, 0
      %p136 = por %p134, %p135
      %p137 = scmp.ne.s32.totalorder %s125, %s126
      %p138 = scmp.eq.s32.totalorder %s32, 1
      %p139 = por %p137, %p138
      %p141 = scmp.ne.s32.totalorder %s126, %s140
      %p142 = scmp.eq.s32.totalorder %s32, 0
      %p143 = por %p141, %p142
      %s145 = sadd.s32 %s144, 1
      %p148 = scmp.eq.s32.totalorder %s26, 1
      %p149 = scmp.ne.s32.totalorder %s144, %s146
      %p150 = scmp.eq.s32.totalorder %s26, 0
      %p151 = por %p149, %p150
      %p152 = scmp.ne.s32.totalorder %s144, %s146
      %p153 = scmp.eq.s32.totalorder %s31, 1
      %p154 = por %p152, %p153
      %p155 = scmp.ne.s32.totalorder %s146, %s147
      %p156 = scmp.eq.s32.totalorder %s31, 0
      %p157 = por %p155, %p156
      %p158 = scmp.ne.s32.totalorder %s146, %s147
      %p159 = scmp.eq.s32.totalorder %s32, 1
      %p160 = por %p158, %p159
      %p162 = scmp.ne.s32.totalorder %s147, %s161
      %p163 = scmp.eq.s32.totalorder %s32, 0
      %p164 = por %p162, %p163
      %s166 = sadd.s32 %s165, 1
      %p169 = scmp.eq.s32.totalorder %s26, 1
      %p170 = scmp.ne.s32.totalorder %s165, %s167
      %p171 = scmp.eq.s32.totalorder %s26, 0
      %p172 = por %p170, %p171
      %p173 = scmp.ne.s32.totalorder %s165, %s167
      %p174 = scmp.eq.s32.totalorder %s31, 1
      %p175 = por %p173, %p174
      %p176 = scmp.ne.s32.totalorder %s167, %s168
      %p177 = scmp.eq.s32.totalorder %s31, 0
      %p178 = por %p176, %p177
      %p179 = scmp.ne.s32.totalorder %s167, %s168
      %p180 = scmp.eq.s32.totalorder %s32, 1
      %p181 = por %p179, %p180
      %p183 = scmp.ne.s32.totalorder %s168, %s182
      %p184 = scmp.eq.s32.totalorder %s32, 0
      %p185 = por %p183, %p184
      %s186 = ssub.s32 %s26, %s33
      %p187 = scmp.eq.s32.totalorder %s186, 0
      %s189 = sadd.s32 %s188, 1
      %s190 = scalar_select %p187, %s188, %s189
      %p193 = pneg %p187
      %p194 = scmp.eq.s32.totalorder %s26, 1
      %p195 = por %p193, %p194
      %p196 = scmp.ne.s32.totalorder %s188, %s191
      %p197 = scmp.eq.s32.totalorder %s26, 0
      %p198 = por %p196, %p197
      %p199 = scmp.ne.s32.totalorder %s188, %s191
      %p200 = scmp.eq.s32.totalorder %s31, 1
      %p201 = por %p199, %p200
      %p202 = scmp.ne.s32.totalorder %s191, %s192
      %p203 = scmp.eq.s32.totalorder %s31, 0
      %p204 = por %p202, %p203
      %p205 = scmp.ne.s32.totalorder %s191, %s192
      %p206 = scmp.eq.s32.totalorder %s32, 1
      %p207 = por %p205, %p206
      %p209 = scmp.ne.s32.totalorder %s192, %s208
      %p210 = scmp.eq.s32.totalorder %s32, 0
      %p211 = por %p209, %p210
      %s212 = ssub.s32 %s26, %s33
      %p213 = scmp.eq.s32.totalorder %s212, 0
      %s215 = sadd.s32 %s214, 1
      %s216 = scalar_select %p213, %s214, %s215
      %p219 = pneg %p213
      %p220 = scmp.eq.s32.totalorder %s26, 1
      %p221 = por %p219, %p220
      %p222 = scmp.ne.s32.totalorder %s214, %s217
      %p223 = scmp.eq.s32.totalorder %s26, 0
      %p224 = por %p222, %p223
      %p225 = scmp.ne.s32.totalorder %s214, %s217
      %p226 = scmp.eq.s32.totalorder %s31, 1
      %p227 = por %p225, %p226
      %p228 = scmp.ne.s32.totalorder %s217, %s218
      %p229 = scmp.eq.s32.totalorder %s31, 0
      %p230 = por %p228, %p229
      %p231 = scmp.ne.s32.totalorder %s217, %s218
      %p232 = scmp.eq.s32.totalorder %s32, 1
      %p233 = por %p231, %p232
      %p235 = scmp.ne.s32.totalorder %s218, %s234
      %p236 = scmp.eq.s32.totalorder %s32, 0
      %p237 = por %p235, %p236
      %p238 = scmp.le.s32.totalorder 1, %s26
      %p239 = scmp.lt.s32.totalorder %s26, 3
      %p240 = pnand %p238, %p239
      %p241 = pneg %p240
      // Predicated region
      $region9: #{tpu_custom_call.1} parent=5 // pred_check
        _
      $region10: #{tpu_custom_call.1} parent=5 // pred_check_branch
        %243 = sbr.rel (%p240) target = $region12
      $region11: #{tpu_custom_call.1} parent=5 // pred_region
        %s244 = ssub.s32 %s26, 1
        // Predicated region
        $region13: #{tpu_custom_call.1} parent=11 // pred_check
          %p245 = pneg %p73
        $region14: #{tpu_custom_call.1} parent=11 // pred_check_branch
          %247 = sbr.rel (%p245) target = $region16
        $region15: #{tpu_custom_call.1} parent=11 // pred_region
          %s249 = ssub.s32 7168, 7168
          %250 = vsyncadd [#allocation6], %s249
          %s251 = sshll.u32 [#allocation5], 4
          %s252 = int_to_ptr.vmem [resolvable:$true] %s251
          %257 = dma.hbm_to_vmem [thread:$0]  %s1, 7168, %s252, [#allocation6], 64, 64, 4
        $region16: #{tpu_custom_call.1} parent=11 // pred_fallthru
          _
        // Predicated region
        $region17: #{tpu_custom_call.1} parent=11 // pred_check
          %p258 = pneg %p94
        $region18: #{tpu_custom_call.1} parent=11 // pred_check_branch
          %260 = sbr.rel (%p258) target = $region20
        $region19: #{tpu_custom_call.1} parent=11 // pred_region
          _
        $region20: #{tpu_custom_call.1} parent=11 // pred_fallthru
          _
        // Predicated region
        $region21: #{tpu_custom_call.1} parent=11 // pred_check
          %p261 = pneg %p115
        $region22: #{tpu_custom_call.1} parent=11 // pred_check_branch
          %263 = sbr.rel (%p261) target = $region24
        $region23: #{tpu_custom_call.1} parent=11 // pred_region
          %s265 = ssub.s32 2048, 2048
          %266 = vsyncadd [#allocation6], %s265
          %s267 = sshll.u32 [#allocation7], 4
          %s268 = int_to_ptr.vmem [resolvable:$true] %s267
          %273 = dma.hbm_to_vmem [thread:$0]  %s3, 2048, %s268, [#allocation6], 128, 128, 8
        $region24: #{tpu_custom_call.1} parent=11 // pred_fallthru
          _
        // Predicated region
        $region25: #{tpu_custom_call.1} parent=11 // pred_check
          %p274 = pneg %p136
        $region26: #{tpu_custom_call.1} parent=11 // pred_check_branch
          %276 = sbr.rel (%p274) target = $region28
        $region27: #{tpu_custom_call.1} parent=11 // pred_region
          _
        $region28: #{tpu_custom_call.1} parent=11 // pred_fallthru
          _
        // Predicated region
        $region29: #{tpu_custom_call.1} parent=11 // pred_check
          %p277 = pneg %p157
        $region30: #{tpu_custom_call.1} parent=11 // pred_check_branch
          %279 = sbr.rel (%p277) target = $region32
        $region31: #{tpu_custom_call.1} parent=11 // pred_region
          %s281 = ssub.s32 2048, 2048
          %282 = vsyncadd [#allocation9], %s281
          %s283 = sshll.u32 [#allocation8], 4
          %s284 = int_to_ptr.vmem [resolvable:$true] %s283
          %289 = dma.hbm_to_vmem [thread:$0]  %s5, 2048, %s284, [#allocation9], 64, 64, 4
        $region32: #{tpu_custom_call.1} parent=11 // pred_fallthru
          _
        // Predicated region
        $region33: #{tpu_custom_call.1} parent=11 // pred_check
          %p290 = pneg %p178
        $region34: #{tpu_custom_call.1} parent=11 // pred_check_branch
          %292 = sbr.rel (%p290) target = $region36
        $region35: #{tpu_custom_call.1} parent=11 // pred_region
          _
        $region36: #{tpu_custom_call.1} parent=11 // pred_fallthru
          _
      $region12: #{tpu_custom_call.1} parent=5 // pred_fallthru
        _
      %p293 = scmp.lt.s32.totalorder %s26, 2
      // Predicated region
      $region37: #{tpu_custom_call.1} parent=5 // pred_check
        %p294 = pneg %p293
      $region38: #{tpu_custom_call.1} parent=5 // pred_check_branch
        %296 = sbr.rel (%p294) target = $region40
      $region39: #{tpu_custom_call.1} parent=5 // pred_region
        // Predicated region
        $region41: #{tpu_custom_call.1} parent=39 // pred_check
          %p297 = pneg %p46
        $region42: #{tpu_custom_call.1} parent=39 // pred_check_branch
          %299 = sbr.rel (%p297) target = $region44
        $region43: #{tpu_custom_call.1} parent=39 // pred_region
          %s300 = sand.u32 %s36, 1
          %s301 = scalar_lea.sflag [#allocation3], %s300
          %s302 = sand.u32 %s36, 1
          %s303 = smul.addr %s302, 448
          %s304 = scalar_lea.vmem [#allocation2], %s303
          %s305 = smul.u32 16, %s26
          %s307 = ssub.s32 7168, 7168
          %308 = vsyncadd %s301, %s307
          %s309 = smul.addr %s305, 7
          %s310 = smul.addr %s309, 64
          %s311 = scalar_lea.hbm %s0, %s310
          %s312 = sshll.u32 %s304, 4
          %s313 = int_to_ptr.vmem [resolvable:$true] %s312
          %318 = dma.hbm_to_vmem [thread:$0]  %s311, 7168, %s313, %s301, 448, 448, 28
        $region44: #{tpu_custom_call.1} parent=39 // pred_fallthru
          _
      $region40: #{tpu_custom_call.1} parent=5 // pred_fallthru
        _
      %p319 = scmp.le.s32.totalorder 1, %s26
      %p320 = scmp.lt.s32.totalorder %s26, 3
      %p321 = pnand %p319, %p320
      %p322 = pneg %p321
      // Predicated region
      $region45: #{tpu_custom_call.1} parent=5 // pred_check
        _
      $region46: #{tpu_custom_call.1} parent=5 // pred_check_branch
        %324 = sbr.rel (%p321) target = $region48
      $region47: #{tpu_custom_call.1} parent=5 // pred_region
        %s325 = ssub.s32 %s26, 1
        %s326 = sand.u32 %s39, 1
        %s327 = scalar_lea.sflag [#allocation3], %s326
        %s328 = sand.u32 %s39, 1
        %s329 = smul.addr %s328, 448
        %s330 = scalar_lea.vmem [#allocation2], %s329
        // Predicated region
        $region49: #{tpu_custom_call.1} parent=47 // pred_check
          %p331 = pneg %p52
        $region50: #{tpu_custom_call.1} parent=47 // pred_check_branch
          %333 = sbr.rel (%p331) target = $region52
        $region51: #{tpu_custom_call.1} parent=47 // pred_region
          %334 = dma.done %s327, 7168
        $region52: #{tpu_custom_call.1} parent=47 // pred_fallthru
          _
        // Predicated region
        $region53: #{tpu_custom_call.1} parent=47 // pred_check
          %p335 = pneg %p73
        $region54: #{tpu_custom_call.1} parent=47 // pred_check_branch
          %337 = sbr.rel (%p335) target = $region56
        $region55: #{tpu_custom_call.1} parent=47 // pred_region
          %338 = dma.done [#allocation6], 7168
        $region56: #{tpu_custom_call.1} parent=47 // pred_fallthru
          _
        // Predicated region
        $region57: #{tpu_custom_call.1} parent=47 // pred_check
          %p339 = pneg %p115
        $region58: #{tpu_custom_call.1} parent=47 // pred_check_branch
          %341 = sbr.rel (%p339) target = $region60
        $region59: #{tpu_custom_call.1} parent=47 // pred_region
          %342 = dma.done [#allocation6], 2048
        $region60: #{tpu_custom_call.1} parent=47 // pred_fallthru
          _
        // Predicated region
        $region61: #{tpu_custom_call.1} parent=47 // pred_check
          %p343 = pneg %p157
        $region62: #{tpu_custom_call.1} parent=47 // pred_check_branch
          %345 = sbr.rel (%p343) target = $region64
        $region63: #{tpu_custom_call.1} parent=47 // pred_region
          %346 = dma.done [#allocation9], 2048
        $region64: #{tpu_custom_call.1} parent=47 // pred_fallthru
          _
        %s347 = sand.u32 %s39, 1
        %s348 = scalar_lea.sflag [#allocation3], %s347
        %s349 = sand.u32 %s39, 1
        %s350 = smul.addr %s349, 448
        %s351 = scalar_lea.vmem [#allocation2], %s350
        %p352 = pneg %p52
        %p353 = pneg %p49
        %p354 = pneg %p73
        %p355 = pneg %p70
        %p356 = pneg %p94
        %p357 = pneg %p91
        %p358 = pneg %p115
        %p359 = pneg %p112
        %p360 = pneg %p136
        %p361 = pneg %p133
        %p362 = pneg %p157
        %p363 = pneg %p154
        %p364 = pneg %p178
        %p365 = pneg %p175
        %p366 = pneg %p204
        %p367 = pneg %p201
        %s368 = sand.u32 %s191, 1
        %s369 = scalar_lea.sflag [#allocation4], %s368
        %s370 = sand.u32 %s191, 1
        %s371 = smul.addr %s370, 128
        %s372 = scalar_lea.vmem [#allocation10], %s371
        %p373 = pneg %p230
        %p374 = pneg %p227
        %s375 = sand.u32 %s217, 1
        %s376 = scalar_lea.sflag [#allocation12], %s375
        %s377 = sand.u32 %s217, 1
        %s378 = smul.addr %s377, 128
        %s379 = scalar_lea.vmem [#allocation11], %s378
        %s380 = smul.u32 16, %s31
        %s381 = smul.u32 16, %s31
        %s382 = smul.u32 16, %s31
        %v384 = vld [vmem:[%s330] sm:$0xff]
        %v385 = vld [vmem:[%s330 + $0x8] sm:$0xff]
        %v386 = vld [vmem:[%s330 + $0x10] sm:$0xff]
        %v387 = vld [vmem:[%s330 + $0x18] sm:$0xf]
        %v388 = vld [vmem:[%s330 + $0x1c] sm:$0xff]
        %v389 = vld [vmem:[%s330 + $0x24] sm:$0xff]
        %v390 = vld [vmem:[%s330 + $0x2c] sm:$0xff]
        %v391 = vld [vmem:[%s330 + $0x34] sm:$0xf]
        %v392 = vld [vmem:[%s330 + $0x38] sm:$0xff]
        %v393 = vld [vmem:[%s330 + $0x40] sm:$0xff]
        %v394 = vld [vmem:[%s330 + $0x48] sm:$0xff]
        %v395 = vld [vmem:[%s330 + $0x50] sm:$0xf]
        %v396 = vld [vmem:[%s330 + $0x54] sm:$0xff]
        %v397 = vld [vmem:[%s330 + $0x5c] sm:$0xff]
        %v398 = vld [vmem:[%s330 + $0x64] sm:$0xff]
        %v399 = vld [vmem:[%s330 + $0x6c] sm:$0xf]
        %v400 = vld [vmem:[%s330 + $0x70] sm:$0xff]
        %v401 = vld [vmem:[%s330 + $0x78] sm:$0xff]
        %v402 = vld [vmem:[%s330 + $0x80] sm:$0xff]
        %v403 = vld [vmem:[%s330 + $0x88] sm:$0xf]
        %v404 = vld [vmem:[%s330 + $0x8c] sm:$0xff]
        %v405 = vld [vmem:[%s330 + $0x94] sm:$0xff]
        %v406 = vld [vmem:[%s330 + $0x9c] sm:$0xff]
        %v407 = vld [vmem:[%s330 + $0xa4] sm:$0xf]
        %v408 = vld [vmem:[%s330 + $0xa8] sm:$0xff]
        %v409 = vld [vmem:[%s330 + $0xb0] sm:$0xff]
        %v410 = vld [vmem:[%s330 + $0xb8] sm:$0xff]
        %v411 = vld [vmem:[%s330 + $0xc0] sm:$0xf]
        %v412 = vld [vmem:[%s330 + $0xc4] sm:$0xff]
        %v413 = vld [vmem:[%s330 + $0xcc] sm:$0xff]
        %v414 = vld [vmem:[%s330 + $0xd4] sm:$0xff]
        %v415 = vld [vmem:[%s330 + $0xdc] sm:$0xf]
        %v416 = vld [vmem:[%s330 + $0xe0] sm:$0xff]
        %v417 = vld [vmem:[%s330 + $0xe8] sm:$0xff]
        %v418 = vld [vmem:[%s330 + $0xf0] sm:$0xff]
        %v419 = vld [vmem:[%s330 + $0xf8] sm:$0xf]
        %v420 = vld [vmem:[%s330 + $0xfc] sm:$0xff]
        %v421 = vld [vmem:[%s330 + $0x104] sm:$0xff]
        %v422 = vld [vmem:[%s330 + $0x10c] sm:$0xff]
        %v423 = vld [vmem:[%s330 + $0x114] sm:$0xf]
        %v424 = vld [vmem:[%s330 + $0x118] sm:$0xff]
        %v425 = vld [vmem:[%s330 + $0x120] sm:$0xff]
        %v426 = vld [vmem:[%s330 + $0x128] sm:$0xff]
        %v427 = vld [vmem:[%s330 + $0x130] sm:$0xf]
        %v428 = vld [vmem:[%s330 + $0x134] sm:$0xff]
        %v429 = vld [vmem:[%s330 + $0x13c] sm:$0xff]
        %v430 = vld [vmem:[%s330 + $0x144] sm:$0xff]
        %v431 = vld [vmem:[%s330 + $0x14c] sm:$0xf]
        %v432 = vld [vmem:[%s330 + $0x150] sm:$0xff]
        %v433 = vld [vmem:[%s330 + $0x158] sm:$0xff]
        %v434 = vld [vmem:[%s330 + $0x160] sm:$0xff]
        %v435 = vld [vmem:[%s330 + $0x168] sm:$0xf]
        %v436 = vld [vmem:[%s330 + $0x16c] sm:$0xff]
        %v437 = vld [vmem:[%s330 + $0x174] sm:$0xff]
        %v438 = vld [vmem:[%s330 + $0x17c] sm:$0xff]
        %v439 = vld [vmem:[%s330 + $0x184] sm:$0xf]
        %v440 = vld [vmem:[%s330 + $0x188] sm:$0xff]
        %v441 = vld [vmem:[%s330 + $0x190] sm:$0xff]
        %v442 = vld [vmem:[%s330 + $0x198] sm:$0xff]
        %v443 = vld [vmem:[%s330 + $0x1a0] sm:$0xf]
        %v444 = vld [vmem:[%s330 + $0x1a4] sm:$0xff]
        %v445 = vld [vmem:[%s330 + $0x1ac] sm:$0xff]
        %v446 = vld [vmem:[%s330 + $0x1b4] sm:$0xff]
        %v447 = vld [vmem:[%s330 + $0x1bc] sm:$0xf]
        %v448 = vld [vmem:[#allocation5] sm:$0xf]
        %v449 = vld [vmem:[#allocation5 + $0x4] sm:$0xf]
        %v450 = vld [vmem:[#allocation5 + $0x8] sm:$0xf]
        %v451 = vld [vmem:[#allocation5 + $0xc] sm:$0xf]
        %v452 = vld [vmem:[#allocation5 + $0x10] sm:$0xf]
        %v453 = vld [vmem:[#allocation5 + $0x14] sm:$0xf]
        %v454 = vld [vmem:[#allocation5 + $0x18] sm:$0xf]
        %v455 = vld [vmem:[#allocation5 + $0x1c] sm:$0xf]
        %v456 = vld [vmem:[#allocation5 + $0x20] sm:$0xf]
        %v457 = vld [vmem:[#allocation5 + $0x24] sm:$0xf]
        %v458 = vld [vmem:[#allocation5 + $0x28] sm:$0xf]
        %v459 = vld [vmem:[#allocation5 + $0x2c] sm:$0xf]
        %v460 = vld [vmem:[#allocation5 + $0x30] sm:$0xf]
        %v461 = vld [vmem:[#allocation5 + $0x34] sm:$0xf]
        %v462 = vld [vmem:[#allocation5 + $0x38] sm:$0xf]
        %v463 = vld [vmem:[#allocation5 + $0x3c] sm:$0xf]
        %v464 = vld [vmem:[#allocation5 + $0x40] sm:$0xf]
        %v465 = vld [vmem:[#allocation5 + $0x44] sm:$0xf]
        %v466 = vld [vmem:[#allocation5 + $0x48] sm:$0xf]
        %v467 = vld [vmem:[#allocation5 + $0x4c] sm:$0xf]
        %v468 = vld [vmem:[#allocation5 + $0x50] sm:$0xf]
        %v469 = vld [vmem:[#allocation5 + $0x54] sm:$0xf]
        %v470 = vld [vmem:[#allocation5 + $0x58] sm:$0xf]
        %v471 = vld [vmem:[#allocation5 + $0x5c] sm:$0xf]
        %v472 = vld [vmem:[#allocation5 + $0x60] sm:$0xf]
        %v473 = vld [vmem:[#allocation5 + $0x64] sm:$0xf]
        %v474 = vld [vmem:[#allocation5 + $0x68] sm:$0xf]
        %v475 = vld [vmem:[#allocation5 + $0x6c] sm:$0xf]
        %v476 = vld [vmem:[#allocation5 + $0x70] sm:$0xf]
        %v477 = vld [vmem:[#allocation5 + $0x74] sm:$0xf]
        %v478 = vld [vmem:[#allocation5 + $0x78] sm:$0xf]
        %v479 = vld [vmem:[#allocation5 + $0x7c] sm:$0xf]
        %v480 = vld [vmem:[#allocation5 + $0x80] sm:$0xf]
        %v481 = vld [vmem:[#allocation5 + $0x84] sm:$0xf]
        %v482 = vld [vmem:[#allocation5 + $0x88] sm:$0xf]
        %v483 = vld [vmem:[#allocation5 + $0x8c] sm:$0xf]
        %v484 = vld [vmem:[#allocation5 + $0x90] sm:$0xf]
        %v485 = vld [vmem:[#allocation5 + $0x94] sm:$0xf]
        %v486 = vld [vmem:[#allocation5 + $0x98] sm:$0xf]
        %v487 = vld [vmem:[#allocation5 + $0x9c] sm:$0xf]
        %v488 = vld [vmem:[#allocation5 + $0xa0] sm:$0xf]
        %v489 = vld [vmem:[#allocation5 + $0xa4] sm:$0xf]
        %v490 = vld [vmem:[#allocation5 + $0xa8] sm:$0xf]
        %v491 = vld [vmem:[#allocation5 + $0xac] sm:$0xf]
        %v492 = vld [vmem:[#allocation5 + $0xb0] sm:$0xf]
        %v493 = vld [vmem:[#allocation5 + $0xb4] sm:$0xf]
        %v494 = vld [vmem:[#allocation5 + $0xb8] sm:$0xf]
        %v495 = vld [vmem:[#allocation5 + $0xbc] sm:$0xf]
        %v496 = vld [vmem:[#allocation5 + $0xc0] sm:$0xf]
        %v497 = vld [vmem:[#allocation5 + $0xc4] sm:$0xf]
        %v498 = vld [vmem:[#allocation5 + $0xc8] sm:$0xf]
        %v499 = vld [vmem:[#allocation5 + $0xcc] sm:$0xf]
        %v500 = vld [vmem:[#allocation5 + $0xd0] sm:$0xf]
        %v501 = vld [vmem:[#allocation5 + $0xd4] sm:$0xf]
        %v502 = vld [vmem:[#allocation5 + $0xd8] sm:$0xf]
        %v503 = vld [vmem:[#allocation5 + $0xdc] sm:$0xf]
        %v504 = vld [vmem:[#allocation5 + $0xe0] sm:$0xf]
        %v505 = vld [vmem:[#allocation5 + $0xe4] sm:$0xf]
        %v506 = vld [vmem:[#allocation5 + $0xe8] sm:$0xf]
        %v507 = vld [vmem:[#allocation5 + $0xec] sm:$0xf]
        %v508 = vld [vmem:[#allocation5 + $0xf0] sm:$0xf]
        %v509 = vld [vmem:[#allocation5 + $0xf4] sm:$0xf]
        %v510 = vld [vmem:[#allocation5 + $0xf8] sm:$0xf]
        %v511 = vld [vmem:[#allocation5 + $0xfc] sm:$0xf]
        %v512 = vld [vmem:[#allocation5 + $0x100] sm:$0xf]
        %v513 = vld [vmem:[#allocation5 + $0x104] sm:$0xf]
        %v514 = vld [vmem:[#allocation5 + $0x108] sm:$0xf]
        %v515 = vld [vmem:[#allocation5 + $0x10c] sm:$0xf]
        %v516 = vld [vmem:[#allocation5 + $0x110] sm:$0xf]
        %v517 = vld [vmem:[#allocation5 + $0x114] sm:$0xf]
        %v518 = vld [vmem:[#allocation5 + $0x118] sm:$0xf]
        %v519 = vld [vmem:[#allocation5 + $0x11c] sm:$0xf]
        %v520 = vld [vmem:[#allocation5 + $0x120] sm:$0xf]
        %v521 = vld [vmem:[#allocation5 + $0x124] sm:$0xf]
        %v522 = vld [vmem:[#allocation5 + $0x128] sm:$0xf]
        %v523 = vld [vmem:[#allocation5 + $0x12c] sm:$0xf]
        %v524 = vld [vmem:[#allocation5 + $0x130] sm:$0xf]
        %v525 = vld [vmem:[#allocation5 + $0x134] sm:$0xf]
        %v526 = vld [vmem:[#allocation5 + $0x138] sm:$0xf]
        %v527 = vld [vmem:[#allocation5 + $0x13c] sm:$0xf]
        %v528 = vld [vmem:[#allocation5 + $0x140] sm:$0xf]
        %v529 = vld [vmem:[#allocation5 + $0x144] sm:$0xf]
        %v530 = vld [vmem:[#allocation5 + $0x148] sm:$0xf]
        %v531 = vld [vmem:[#allocation5 + $0x14c] sm:$0xf]
        %v532 = vld [vmem:[#allocation5 + $0x150] sm:$0xf]
        %v533 = vld [vmem:[#allocation5 + $0x154] sm:$0xf]
        %v534 = vld [vmem:[#allocation5 + $0x158] sm:$0xf]
        %v535 = vld [vmem:[#allocation5 + $0x15c] sm:$0xf]
        %v536 = vld [vmem:[#allocation5 + $0x160] sm:$0xf]
        %v537 = vld [vmem:[#allocation5 + $0x164] sm:$0xf]
        %v538 = vld [vmem:[#allocation5 + $0x168] sm:$0xf]
        %v539 = vld [vmem:[#allocation5 + $0x16c] sm:$0xf]
        %v540 = vld [vmem:[#allocation5 + $0x170] sm:$0xf]
        %v541 = vld [vmem:[#allocation5 + $0x174] sm:$0xf]
        %v542 = vld [vmem:[#allocation5 + $0x178] sm:$0xf]
        %v543 = vld [vmem:[#allocation5 + $0x17c] sm:$0xf]
        %v544 = vld [vmem:[#allocation5 + $0x180] sm:$0xf]
        %v545 = vld [vmem:[#allocation5 + $0x184] sm:$0xf]
        %v546 = vld [vmem:[#allocation5 + $0x188] sm:$0xf]
        %v547 = vld [vmem:[#allocation5 + $0x18c] sm:$0xf]
        %v548 = vld [vmem:[#allocation5 + $0x190] sm:$0xf]
        %v549 = vld [vmem:[#allocation5 + $0x194] sm:$0xf]
        %v550 = vld [vmem:[#allocation5 + $0x198] sm:$0xf]
        %v551 = vld [vmem:[#allocation5 + $0x19c] sm:$0xf]
        %v552 = vld [vmem:[#allocation5 + $0x1a0] sm:$0xf]
        %v553 = vld [vmem:[#allocation5 + $0x1a4] sm:$0xf]
        %v554 = vld [vmem:[#allocation5 + $0x1a8] sm:$0xf]
        %v555 = vld [vmem:[#allocation5 + $0x1ac] sm:$0xf]
        %v556 = vld [vmem:[#allocation5 + $0x1b0] sm:$0xf]
        %v557 = vld [vmem:[#allocation5 + $0x1b4] sm:$0xf]
        %v558 = vld [vmem:[#allocation5 + $0x1b8] sm:$0xf]
        %v559 = vld [vmem:[#allocation5 + $0x1bc] sm:$0xf]
        %v560 = vld [vmem:[%s2] sm:$0x1]
        %v562 = vlaneseq
        %v563 = vshrl.u32 %v562, 7
        %v564 = vsub.s32 0, %v563
        %v565 = vrot.slane %v560, %v564
        %v631 = vunpack.c.l.b16 %v384
        %v632 = vunpack.c.h.b16 %v384
        %v633 = vunpack.c.l.b16 %v385
        %v634 = vunpack.c.h.b16 %v385
        %v635 = vunpack.c.l.b16 %v386
        %v636 = vunpack.c.h.b16 %v386
        %v637 = vunpack.c.l.b16 %v387
        %v638 = vunpack.c.l.b16 %v388
        %v639 = vunpack.c.h.b16 %v388
        %v640 = vunpack.c.l.b16 %v389
        %v641 = vunpack.c.h.b16 %v389
        %v642 = vunpack.c.l.b16 %v390
        %v643 = vunpack.c.h.b16 %v390
        %v644 = vunpack.c.l.b16 %v391
        %v645 = vunpack.c.l.b16 %v392
        %v646 = vunpack.c.h.b16 %v392
        %v647 = vunpack.c.l.b16 %v393
        %v648 = vunpack.c.h.b16 %v393
        %v649 = vunpack.c.l.b16 %v394
        %v650 = vunpack.c.h.b16 %v394
        %v651 = vunpack.c.l.b16 %v395
        %v652 = vunpack.c.l.b16 %v396
        %v653 = vunpack.c.h.b16 %v396
        %v654 = vunpack.c.l.b16 %v397
        %v655 = vunpack.c.h.b16 %v397
        %v656 = vunpack.c.l.b16 %v398
        %v657 = vunpack.c.h.b16 %v398
        %v658 = vunpack.c.l.b16 %v399
        %v659 = vunpack.c.l.b16 %v400
        %v660 = vunpack.c.h.b16 %v400
        %v661 = vunpack.c.l.b16 %v401
        %v662 = vunpack.c.h.b16 %v401
        %v663 = vunpack.c.l.b16 %v402
        %v664 = vunpack.c.h.b16 %v402
        %v665 = vunpack.c.l.b16 %v403
        %v666 = vunpack.c.l.b16 %v404
        %v667 = vunpack.c.h.b16 %v404
        %v668 = vunpack.c.l.b16 %v405
        %v669 = vunpack.c.h.b16 %v405
        %v670 = vunpack.c.l.b16 %v406
        %v671 = vunpack.c.h.b16 %v406
        %v672 = vunpack.c.l.b16 %v407
        %v673 = vunpack.c.l.b16 %v408
        %v674 = vunpack.c.h.b16 %v408
        %v675 = vunpack.c.l.b16 %v409
        %v676 = vunpack.c.h.b16 %v409
        %v677 = vunpack.c.l.b16 %v410
        %v678 = vunpack.c.h.b16 %v410
        %v679 = vunpack.c.l.b16 %v411
        %v680 = vunpack.c.l.b16 %v412
        %v681 = vunpack.c.h.b16 %v412
        %v682 = vunpack.c.l.b16 %v413
        %v683 = vunpack.c.h.b16 %v413
        %v684 = vunpack.c.l.b16 %v414
        %v685 = vunpack.c.h.b16 %v414
        %v686 = vunpack.c.l.b16 %v415
        %v687 = vunpack.c.l.b16 %v416
        %v688 = vunpack.c.h.b16 %v416
        %v689 = vunpack.c.l.b16 %v417
        %v690 = vunpack.c.h.b16 %v417
        %v691 = vunpack.c.l.b16 %v418
        %v692 = vunpack.c.h.b16 %v418
        %v693 = vunpack.c.l.b16 %v419
        %v694 = vunpack.c.l.b16 %v420
        %v695 = vunpack.c.h.b16 %v420
        %v696 = vunpack.c.l.b16 %v421
        %v697 = vunpack.c.h.b16 %v421
        %v698 = vunpack.c.l.b16 %v422
        %v699 = vunpack.c.h.b16 %v422
        %v700 = vunpack.c.l.b16 %v423
        %v701 = vunpack.c.l.b16 %v424
        %v702 = vunpack.c.h.b16 %v424
        %v703 = vunpack.c.l.b16 %v425
        %v704 = vunpack.c.h.b16 %v425
        %v705 = vunpack.c.l.b16 %v426
        %v706 = vunpack.c.h.b16 %v426
        %v707 = vunpack.c.l.b16 %v427
        %v708 = vunpack.c.l.b16 %v428
        %v709 = vunpack.c.h.b16 %v428
        %v710 = vunpack.c.l.b16 %v429
        %v711 = vunpack.c.h.b16 %v429
        %v712 = vunpack.c.l.b16 %v430
        %v713 = vunpack.c.h.b16 %v430
        %v714 = vunpack.c.l.b16 %v431
        %v715 = vunpack.c.l.b16 %v432
        %v716 = vunpack.c.h.b16 %v432
        %v717 = vunpack.c.l.b16 %v433
        %v718 = vunpack.c.h.b16 %v433
        %v719 = vunpack.c.l.b16 %v434
        %v720 = vunpack.c.h.b16 %v434
        %v721 = vunpack.c.l.b16 %v435
        %v722 = vunpack.c.l.b16 %v436
        %v723 = vunpack.c.h.b16 %v436
        %v724 = vunpack.c.l.b16 %v437
        %v725 = vunpack.c.h.b16 %v437
        %v726 = vunpack.c.l.b16 %v438
        %v727 = vunpack.c.h.b16 %v438
        %v728 = vunpack.c.l.b16 %v439
        %v729 = vunpack.c.l.b16 %v440
        %v730 = vunpack.c.h.b16 %v440
        %v731 = vunpack.c.l.b16 %v441
        %v732 = vunpack.c.h.b16 %v441
        %v733 = vunpack.c.l.b16 %v442
        %v734 = vunpack.c.h.b16 %v442
        %v735 = vunpack.c.l.b16 %v443
        %v736 = vunpack.c.l.b16 %v444
        %v737 = vunpack.c.h.b16 %v444
        %v738 = vunpack.c.l.b16 %v445
        %v739 = vunpack.c.h.b16 %v445
        %v740 = vunpack.c.l.b16 %v446
        %v741 = vunpack.c.h.b16 %v446
        %v742 = vunpack.c.l.b16 %v447
        %v743 = vpack.c.b16 %v638, %v631
        %v744 = vpack.c.b16 %v639, %v632
        %v745 = vpack.c.b16 %v640, %v633
        %v746 = vpack.c.b16 %v641, %v634
        %v747 = vpack.c.b16 %v642, %v635
        %v748 = vpack.c.b16 %v643, %v636
        %v749 = vpack.c.b16 %v644, %v637
        %v750 = vpack.c.b16 %v652, %v645
        %v751 = vpack.c.b16 %v653, %v646
        %v752 = vpack.c.b16 %v654, %v647
        %v753 = vpack.c.b16 %v655, %v648
        %v754 = vpack.c.b16 %v656, %v649
        %v755 = vpack.c.b16 %v657, %v650
        %v756 = vpack.c.b16 %v658, %v651
        %v757 = vpack.c.b16 %v666, %v659
        %v758 = vpack.c.b16 %v667, %v660
        %v759 = vpack.c.b16 %v668, %v661
        %v760 = vpack.c.b16 %v669, %v662
        %v761 = vpack.c.b16 %v670, %v663
        %v762 = vpack.c.b16 %v671, %v664
        %v763 = vpack.c.b16 %v672, %v665
        %v764 = vpack.c.b16 %v680, %v673
        %v765 = vpack.c.b16 %v681, %v674
        %v766 = vpack.c.b16 %v682, %v675
        %v767 = vpack.c.b16 %v683, %v676
        %v768 = vpack.c.b16 %v684, %v677
        %v769 = vpack.c.b16 %v685, %v678
        %v770 = vpack.c.b16 %v686, %v679
        %v771 = vpack.c.b16 %v694, %v687
        %v772 = vpack.c.b16 %v695, %v688
        %v773 = vpack.c.b16 %v696, %v689
        %v774 = vpack.c.b16 %v697, %v690
        %v775 = vpack.c.b16 %v698, %v691
        %v776 = vpack.c.b16 %v699, %v692
        %v777 = vpack.c.b16 %v700, %v693
        %v778 = vpack.c.b16 %v708, %v701
        %v779 = vpack.c.b16 %v709, %v702
        %v780 = vpack.c.b16 %v710, %v703
        %v781 = vpack.c.b16 %v711, %v704
        %v782 = vpack.c.b16 %v712, %v705
        %v783 = vpack.c.b16 %v713, %v706
        %v784 = vpack.c.b16 %v714, %v707
        %v785 = vpack.c.b16 %v722, %v715
        %v786 = vpack.c.b16 %v723, %v716
        %v787 = vpack.c.b16 %v724, %v717
        %v788 = vpack.c.b16 %v725, %v718
        %v789 = vpack.c.b16 %v726, %v719
        %v790 = vpack.c.b16 %v727, %v720
        %v791 = vpack.c.b16 %v728, %v721
        %v792 = vpack.c.b16 %v736, %v729
        %v793 = vpack.c.b16 %v737, %v730
        %v794 = vpack.c.b16 %v738, %v731
        %v795 = vpack.c.b16 %v739, %v732
        %v796 = vpack.c.b16 %v740, %v733
        %v797 = vpack.c.b16 %v741, %v734
        %v798 = vpack.c.b16 %v742, %v735
        %v967 = vunpack.c.l.b16 %v448
        %v968 = vunpack.c.l.b16 %v449
        %v969 = vunpack.c.l.b16 %v450
        %v970 = vunpack.c.l.b16 %v451
        %v971 = vunpack.c.l.b16 %v452
        %v972 = vunpack.c.l.b16 %v453
        %v973 = vunpack.c.l.b16 %v454
        %v974 = vunpack.c.l.b16 %v455
        %v975 = vunpack.c.l.b16 %v456
        %v976 = vunpack.c.l.b16 %v457
        %v977 = vunpack.c.l.b16 %v458
        %v978 = vunpack.c.l.b16 %v459
        %v979 = vunpack.c.l.b16 %v460
        %v980 = vunpack.c.l.b16 %v461
        %v981 = vunpack.c.l.b16 %v462
        %v982 = vunpack.c.l.b16 %v463
        %v983 = vunpack.c.l.b16 %v464
        %v984 = vunpack.c.l.b16 %v465
        %v985 = vunpack.c.l.b16 %v466
        %v986 = vunpack.c.l.b16 %v467
        %v987 = vunpack.c.l.b16 %v468
        %v988 = vunpack.c.l.b16 %v469
        %v989 = vunpack.c.l.b16 %v470
        %v990 = vunpack.c.l.b16 %v471
        %v991 = vunpack.c.l.b16 %v472
        %v992 = vunpack.c.l.b16 %v473
        %v993 = vunpack.c.l.b16 %v474
        %v994 = vunpack.c.l.b16 %v475
        %v995 = vunpack.c.l.b16 %v476
        %v996 = vunpack.c.l.b16 %v477
        %v997 = vunpack.c.l.b16 %v478
        %v998 = vunpack.c.l.b16 %v479
        %v999 = vunpack.c.l.b16 %v480
        %v1000 = vunpack.c.l.b16 %v481
        %v1001 = vunpack.c.l.b16 %v482
        %v1002 = vunpack.c.l.b16 %v483
        %v1003 = vunpack.c.l.b16 %v484
        %v1004 = vunpack.c.l.b16 %v485
        %v1005 = vunpack.c.l.b16 %v486
        %v1006 = vunpack.c.l.b16 %v487
        %v1007 = vunpack.c.l.b16 %v488
        %v1008 = vunpack.c.l.b16 %v489
        %v1009 = vunpack.c.l.b16 %v490
        %v1010 = vunpack.c.l.b16 %v491
        %v1011 = vunpack.c.l.b16 %v492
        %v1012 = vunpack.c.l.b16 %v493
        %v1013 = vunpack.c.l.b16 %v494
        %v1014 = vunpack.c.l.b16 %v495
        %v1015 = vunpack.c.l.b16 %v496
        %v1016 = vunpack.c.l.b16 %v497
        %v1017 = vunpack.c.l.b16 %v498
        %v1018 = vunpack.c.l.b16 %v499
        %v1019 = vunpack.c.l.b16 %v500
        %v1020 = vunpack.c.l.b16 %v501
        %v1021 = vunpack.c.l.b16 %v502
        %v1022 = vunpack.c.l.b16 %v503
        %v1023 = vunpack.c.l.b16 %v504
        %v1024 = vunpack.c.l.b16 %v505
        %v1025 = vunpack.c.l.b16 %v506
        %v1026 = vunpack.c.l.b16 %v507
        %v1027 = vunpack.c.l.b16 %v508
        %v1028 = vunpack.c.l.b16 %v509
        %v1029 = vunpack.c.l.b16 %v510
        %v1030 = vunpack.c.l.b16 %v511
        %v1031 = vunpack.c.l.b16 %v512
        %v1032 = vunpack.c.l.b16 %v513
        %v1033 = vunpack.c.l.b16 %v514
        %v1034 = vunpack.c.l.b16 %v515
        %v1035 = vunpack.c.l.b16 %v516
        %v1036 = vunpack.c.l.b16 %v517
        %v1037 = vunpack.c.l.b16 %v518
        %v1038 = vunpack.c.l.b16 %v519
        %v1039 = vunpack.c.l.b16 %v520
        %v1040 = vunpack.c.l.b16 %v521
        %v1041 = vunpack.c.l.b16 %v522
        %v1042 = vunpack.c.l.b16 %v523
        %v1043 = vunpack.c.l.b16 %v524
        %v1044 = vunpack.c.l.b16 %v525
        %v1045 = vunpack.c.l.b16 %v526
        %v1046 = vunpack.c.l.b16 %v527
        %v1047 = vunpack.c.l.b16 %v528
        %v1048 = vunpack.c.l.b16 %v529
        %v1049 = vunpack.c.l.b16 %v530
        %v1050 = vunpack.c.l.b16 %v531
        %v1051 = vunpack.c.l.b16 %v532
        %v1052 = vunpack.c.l.b16 %v533
        %v1053 = vunpack.c.l.b16 %v534
        %v1054 = vunpack.c.l.b16 %v535
        %v1055 = vunpack.c.l.b16 %v536
        %v1056 = vunpack.c.l.b16 %v537
        %v1057 = vunpack.c.l.b16 %v538
        %v1058 = vunpack.c.l.b16 %v539
        %v1059 = vunpack.c.l.b16 %v540
        %v1060 = vunpack.c.l.b16 %v541
        %v1061 = vunpack.c.l.b16 %v542
        %v1062 = vunpack.c.l.b16 %v543
        %v1063 = vunpack.c.l.b16 %v544
        %v1064 = vunpack.c.l.b16 %v545
        %v1065 = vunpack.c.l.b16 %v546
        %v1066 = vunpack.c.l.b16 %v547
        %v1067 = vunpack.c.l.b16 %v548
        %v1068 = vunpack.c.l.b16 %v549
        %v1069 = vunpack.c.l.b16 %v550
        %v1070 = vunpack.c.l.b16 %v551
        %v1071 = vunpack.c.l.b16 %v552
        %v1072 = vunpack.c.l.b16 %v553
        %v1073 = vunpack.c.l.b16 %v554
        %v1074 = vunpack.c.l.b16 %v555
        %v1075 = vunpack.c.l.b16 %v556
        %v1076 = vunpack.c.l.b16 %v557
        %v1077 = vunpack.c.l.b16 %v558
        %v1078 = vunpack.c.l.b16 %v559
        %v1079 = vpack.c.b16 %v968, %v967
        %v1080 = vpack.c.b16 %v970, %v969
        %v1081 = vpack.c.b16 %v972, %v971
        %v1082 = vpack.c.b16 %v974, %v973
        %v1083 = vpack.c.b16 %v976, %v975
        %v1084 = vpack.c.b16 %v978, %v977
        %v1085 = vpack.c.b16 %v980, %v979
        %v1086 = vpack.c.b16 %v982, %v981
        %v1087 = vpack.c.b16 %v984, %v983
        %v1088 = vpack.c.b16 %v986, %v985
        %v1089 = vpack.c.b16 %v988, %v987
        %v1090 = vpack.c.b16 %v990, %v989
        %v1091 = vpack.c.b16 %v992, %v991
        %v1092 = vpack.c.b16 %v994, %v993
        %v1093 = vpack.c.b16 %v996, %v995
        %v1094 = vpack.c.b16 %v998, %v997
        %v1095 = vpack.c.b16 %v1000, %v999
        %v1096 = vpack.c.b16 %v1002, %v1001
        %v1097 = vpack.c.b16 %v1004, %v1003
        %v1098 = vpack.c.b16 %v1006, %v1005
        %v1099 = vpack.c.b16 %v1008, %v1007
        %v1100 = vpack.c.b16 %v1010, %v1009
        %v1101 = vpack.c.b16 %v1012, %v1011
        %v1102 = vpack.c.b16 %v1014, %v1013
        %v1103 = vpack.c.b16 %v1016, %v1015
        %v1104 = vpack.c.b16 %v1018, %v1017
        %v1105 = vpack.c.b16 %v1020, %v1019
        %v1106 = vpack.c.b16 %v1022, %v1021
        %v1107 = vpack.c.b16 %v1024, %v1023
        %v1108 = vpack.c.b16 %v1026, %v1025
        %v1109 = vpack.c.b16 %v1028, %v1027
        %v1110 = vpack.c.b16 %v1030, %v1029
        %v1111 = vpack.c.b16 %v1032, %v1031
        %v1112 = vpack.c.b16 %v1034, %v1033
        %v1113 = vpack.c.b16 %v1036, %v1035
        %v1114 = vpack.c.b16 %v1038, %v1037
        %v1115 = vpack.c.b16 %v1040, %v1039
        %v1116 = vpack.c.b16 %v1042, %v1041
        %v1117 = vpack.c.b16 %v1044, %v1043
        %v1118 = vpack.c.b16 %v1046, %v1045
        %v1119 = vpack.c.b16 %v1048, %v1047
        %v1120 = vpack.c.b16 %v1050, %v1049
        %v1121 = vpack.c.b16 %v1052, %v1051
        %v1122 = vpack.c.b16 %v1054, %v1053
        %v1123 = vpack.c.b16 %v1056, %v1055
        %v1124 = vpack.c.b16 %v1058, %v1057
        %v1125 = vpack.c.b16 %v1060, %v1059
        %v1126 = vpack.c.b16 %v1062, %v1061
        %v1127 = vpack.c.b16 %v1064, %v1063
        %v1128 = vpack.c.b16 %v1066, %v1065
        %v1129 = vpack.c.b16 %v1068, %v1067
        %v1130 = vpack.c.b16 %v1070, %v1069
        %v1131 = vpack.c.b16 %v1072, %v1071
        %v1132 = vpack.c.b16 %v1074, %v1073
        %v1133 = vpack.c.b16 %v1076, %v1075
        %v1134 = vpack.c.b16 %v1078, %v1077
        %1191 = vmatprep.subr.bf16.mxu0 0
        %1192 = vmatpush1.bf16.msra.mxu0 %v1086
        %1193 = vmatprep.subr.bf16.mxu0 0
        %1194 = vmatpush1.bf16.msra.mxu0 %v1085
        %1195 = vmatprep.subr.bf16.mxu0 0
        %1196 = vmatpush1.bf16.msra.mxu0 %v1084
        %1197 = vmatprep.subr.bf16.mxu0 0
        %1198 = vmatpush1.bf16.msra.mxu0 %v1083
        %1199 = vmatprep.subr.bf16.mxu0 0
        %1200 = vmatpush1.bf16.msra.mxu0 %v1082
        %1201 = vmatprep.subr.bf16.mxu0 0
        %1202 = vmatpush1.bf16.msra.mxu0 %v1081
        %1203 = vmatprep.subr.bf16.mxu0 0
        %1204 = vmatpush1.bf16.msra.mxu0 %v1080
        %1205 = vmatprep.subr.bf16.mxu0 0
        %1206 = vmatpush1.bf16.msra.mxu0 %v1079
        %1207 = vmatprep.subr.bf16.mxu0 0
        %1208 = vmatpush2.bf16.msra.mxu0 %v1094
        %1209 = vmatprep.subr.bf16.mxu0 0
        %1210 = vmatpush2.bf16.msra.mxu0 %v1093
        %1211 = vmatprep.subr.bf16.mxu0 0
        %1212 = vmatpush2.bf16.msra.mxu0 %v1092
        %1213 = vmatprep.subr.bf16.mxu0 0
        %1214 = vmatpush2.bf16.msra.mxu0 %v1091
        %1215 = vmatprep.subr.bf16.mxu0 0
        %1216 = vmatpush2.bf16.msra.mxu0 %v1090
        %1217 = vmatprep.subr.bf16.mxu0 0
        %1218 = vmatpush2.bf16.msra.mxu0 %v1089
        %1219 = vmatprep.subr.bf16.mxu0 0
        %1220 = vmatpush2.bf16.msra.mxu0 %v1088
        %1221 = vmatprep.subr.bf16.mxu0 0
        %1222 = vmatpush2.bf16.msra.mxu0 %v1087
        %1223 = vmatprep.mubr.bf16.mxu0 %v744
        %1224 = vmatmul.mubr.bf16.gmra.mxu0 %v743
        %v1225 = vpop.f32.mrf.mxu0
        %v1226 = vadd.f32 %v565, %v1225
        %v1227 = vpop.f32.mrf.mxu0
        %v1228 = vpop.f32.mrf.mxu0
        %v1229 = vadd.f32 %v565, %v1228
        %v1230 = vpop.f32.mrf.mxu0
        %1231 = vmatprep.mubr.bf16.mxu0 %v751
        %1232 = vmatmul.mubr.bf16.gmra.mxu0 %v750
        %v1233 = vpop.f32.mrf.mxu0
        %v1234 = vadd.f32 %v565, %v1233
        %v1235 = vpop.f32.mrf.mxu0
        %v1236 = vpop.f32.mrf.mxu0
        %v1237 = vadd.f32 %v565, %v1236
        %v1238 = vpop.f32.mrf.mxu0
        %1239 = vmatprep.mubr.bf16.mxu0 %v758
        %1240 = vmatmul.mubr.bf16.gmra.mxu0 %v757
        %v1241 = vpop.f32.mrf.mxu0
        %v1242 = vadd.f32 %v565, %v1241
        %v1243 = vpop.f32.mrf.mxu0
        %v1244 = vpop.f32.mrf.mxu0
        %v1245 = vadd.f32 %v565, %v1244
        %v1246 = vpop.f32.mrf.mxu0
        %1247 = vmatprep.mubr.bf16.mxu0 %v765
        %1248 = vmatmul.mubr.bf16.gmra.mxu0 %v764
        %v1249 = vpop.f32.mrf.mxu0
        %v1250 = vadd.f32 %v565, %v1249
        %v1251 = vpop.f32.mrf.mxu0
        %v1252 = vpop.f32.mrf.mxu0
        %v1253 = vadd.f32 %v565, %v1252
        %v1254 = vpop.f32.mrf.mxu0
        %1255 = vmatprep.mubr.bf16.mxu0 %v772
        %1256 = vmatmul.mubr.bf16.gmra.mxu0 %v771
        %v1257 = vpop.f32.mrf.mxu0
        %v1258 = vadd.f32 %v565, %v1257
        %v1259 = vpop.f32.mrf.mxu0
        %v1260 = vpop.f32.mrf.mxu0
        %v1261 = vadd.f32 %v565, %v1260
        %v1262 = vpop.f32.mrf.mxu0
        %1263 = vmatprep.mubr.bf16.mxu0 %v779
        %1264 = vmatmul.mubr.bf16.gmra.mxu0 %v778
        %v1265 = vpop.f32.mrf.mxu0
        %v1266 = vadd.f32 %v565, %v1265
        %v1267 = vpop.f32.mrf.mxu0
        %v1268 = vpop.f32.mrf.mxu0
        %v1269 = vadd.f32 %v565, %v1268
        %v1270 = vpop.f32.mrf.mxu0
        %1271 = vmatprep.mubr.bf16.mxu0 %v786
        %1272 = vmatmul.mubr.bf16.gmra.mxu0 %v785
        %v1273 = vpop.f32.mrf.mxu0
        %v1274 = vadd.f32 %v565, %v1273
        %v1275 = vpop.f32.mrf.mxu0
        %v1276 = vpop.f32.mrf.mxu0
        %v1277 = vadd.f32 %v565, %v1276
        %v1278 = vpop.f32.mrf.mxu0
        %1279 = vmatprep.mubr.bf16.mxu0 %v793
        %1280 = vmatmul.mubr.bf16.gmra.mxu0 %v792
        %v1281 = vpop.f32.mrf.mxu0
        %v1282 = vadd.f32 %v565, %v1281
        %v1283 = vpop.f32.mrf.mxu0
        %v1284 = vpop.f32.mrf.mxu0
        %v1285 = vadd.f32 %v565, %v1284
        %v1286 = vpop.f32.mrf.mxu0
        %1287 = vdwg.mxu0
        %1288 = vmatprep.subr.bf16.mxu0 0
        %1289 = vmatpush1.bf16.msra.mxu0 %v1102
        %1290 = vmatprep.subr.bf16.mxu0 0
        %1291 = vmatpush1.bf16.msra.mxu0 %v1101
        %1292 = vmatprep.subr.bf16.mxu0 0
        %1293 = vmatpush1.bf16.msra.mxu0 %v1100
        %1294 = vmatprep.subr.bf16.mxu0 0
        %1295 = vmatpush1.bf16.msra.mxu0 %v1099
        %1296 = vmatprep.subr.bf16.mxu0 0
        %1297 = vmatpush1.bf16.msra.mxu0 %v1098
        %1298 = vmatprep.subr.bf16.mxu0 0
        %1299 = vmatpush1.bf16.msra.mxu0 %v1097
        %1300 = vmatprep.subr.bf16.mxu0 0
        %1301 = vmatpush1.bf16.msra.mxu0 %v1096
        %1302 = vmatprep.subr.bf16.mxu0 0
        %1303 = vmatpush1.bf16.msra.mxu0 %v1095
        %1304 = vmatprep.subr.bf16.mxu0 0
        %1305 = vmatpush2.bf16.msra.mxu0 %v1110
        %1306 = vmatprep.subr.bf16.mxu0 0
        %1307 = vmatpush2.bf16.msra.mxu0 %v1109
        %1308 = vmatprep.subr.bf16.mxu0 0
        %1309 = vmatpush2.bf16.msra.mxu0 %v1108
        %1310 = vmatprep.subr.bf16.mxu0 0
        %1311 = vmatpush2.bf16.msra.mxu0 %v1107
        %1312 = vmatprep.subr.bf16.mxu0 0
        %1313 = vmatpush2.bf16.msra.mxu0 %v1106
        %1314 = vmatprep.subr.bf16.mxu0 0
        %1315 = vmatpush2.bf16.msra.mxu0 %v1105
        %1316 = vmatprep.subr.bf16.mxu0 0
        %1317 = vmatpush2.bf16.msra.mxu0 %v1104
        %1318 = vmatprep.subr.bf16.mxu0 0
        %1319 = vmatpush2.bf16.msra.mxu0 %v1103
        %1320 = vmatprep.mubr.bf16.mxu0 %v746
        %1321 = vmatmul.mubr.bf16.gmra.mxu0 %v745
        %v1322 = vpop.f32.mrf.mxu0
        %v1323 = vadd.f32 %v1226, %v1322
        %v1324 = vpop.f32.mrf.mxu0
        %v1325 = vpop.f32.mrf.mxu0
        %v1326 = vadd.f32 %v1229, %v1325
        %v1327 = vpop.f32.mrf.mxu0
        %1328 = vmatprep.mubr.bf16.mxu0 %v753
        %1329 = vmatmul.mubr.bf16.gmra.mxu0 %v752
        %v1330 = vpop.f32.mrf.mxu0
        %v1331 = vadd.f32 %v1234, %v1330
        %v1332 = vpop.f32.mrf.mxu0
        %v1333 = vpop.f32.mrf.mxu0
        %v1334 = vadd.f32 %v1237, %v1333
        %v1335 = vpop.f32.mrf.mxu0
        %1336 = vmatprep.mubr.bf16.mxu0 %v760
        %1337 = vmatmul.mubr.bf16.gmra.mxu0 %v759
        %v1338 = vpop.f32.mrf.mxu0
        %v1339 = vadd.f32 %v1242, %v1338
        %v1340 = vpop.f32.mrf.mxu0
        %v1341 = vpop.f32.mrf.mxu0
        %v1342 = vadd.f32 %v1245, %v1341
        %v1343 = vpop.f32.mrf.mxu0
        %1344 = vmatprep.mubr.bf16.mxu0 %v767
        %1345 = vmatmul.mubr.bf16.gmra.mxu0 %v766
        %v1346 = vpop.f32.mrf.mxu0
        %v1347 = vadd.f32 %v1250, %v1346
        %v1348 = vpop.f32.mrf.mxu0
        %v1349 = vpop.f32.mrf.mxu0
        %v1350 = vadd.f32 %v1253, %v1349
        %v1351 = vpop.f32.mrf.mxu0
        %1352 = vmatprep.mubr.bf16.mxu0 %v774
        %1353 = vmatmul.mubr.bf16.gmra.mxu0 %v773
        %v1354 = vpop.f32.mrf.mxu0
        %v1355 = vadd.f32 %v1258, %v1354
        %v1356 = vpop.f32.mrf.mxu0
        %v1357 = vpop.f32.mrf.mxu0
        %v1358 = vadd.f32 %v1261, %v1357
        %v1359 = vpop.f32.mrf.mxu0
        %1360 = vmatprep.mubr.bf16.mxu0 %v781
        %1361 = vmatmul.mubr.bf16.gmra.mxu0 %v780
        %v1362 = vpop.f32.mrf.mxu0
        %v1363 = vadd.f32 %v1266, %v1362
        %v1364 = vpop.f32.mrf.mxu0
        %v1365 = vpop.f32.mrf.mxu0
        %v1366 = vadd.f32 %v1269, %v1365
        %v1367 = vpop.f32.mrf.mxu0
        %1368 = vmatprep.mubr.bf16.mxu0 %v788
        %1369 = vmatmul.mubr.bf16.gmra.mxu0 %v787
        %v1370 = vpop.f32.mrf.mxu0
        %v1371 = vadd.f32 %v1274, %v1370
        %v1372 = vpop.f32.mrf.mxu0
        %v1373 = vpop.f32.mrf.mxu0
        %v1374 = vadd.f32 %v1277, %v1373
        %v1375 = vpop.f32.mrf.mxu0
        %1376 = vmatprep.mubr.bf16.mxu0 %v795
        %1377 = vmatmul.mubr.bf16.gmra.mxu0 %v794
        %v1378 = vpop.f32.mrf.mxu0
        %v1379 = vadd.f32 %v1282, %v1378
        %v1380 = vpop.f32.mrf.mxu0
        %v1381 = vpop.f32.mrf.mxu0
        %v1382 = vadd.f32 %v1285, %v1381
        %v1383 = vpop.f32.mrf.mxu0
        %1384 = vdwg.mxu0
        %1385 = vmatprep.subr.bf16.mxu0 0
        %1386 = vmatpush1.bf16.msra.mxu0 %v1118
        %1387 = vmatprep.subr.bf16.mxu0 0
        %1388 = vmatpush1.bf16.msra.mxu0 %v1117
        %1389 = vmatprep.subr.bf16.mxu0 0
        %1390 = vmatpush1.bf16.msra.mxu0 %v1116
        %1391 = vmatprep.subr.bf16.mxu0 0
        %1392 = vmatpush1.bf16.msra.mxu0 %v1115
        %1393 = vmatprep.subr.bf16.mxu0 0
        %1394 = vmatpush1.bf16.msra.mxu0 %v1114
        %1395 = vmatprep.subr.bf16.mxu0 0
        %1396 = vmatpush1.bf16.msra.mxu0 %v1113
        %1397 = vmatprep.subr.bf16.mxu0 0
        %1398 = vmatpush1.bf16.msra.mxu0 %v1112
        %1399 = vmatprep.subr.bf16.mxu0 0
        %1400 = vmatpush1.bf16.msra.mxu0 %v1111
        %1401 = vmatprep.subr.bf16.mxu0 0
        %1402 = vmatpush2.bf16.msra.mxu0 %v1126
        %1403 = vmatprep.subr.bf16.mxu0 0
        %1404 = vmatpush2.bf16.msra.mxu0 %v1125
        %1405 = vmatprep.subr.bf16.mxu0 0
        %1406 = vmatpush2.bf16.msra.mxu0 %v1124
        %1407 = vmatprep.subr.bf16.mxu0 0
        %1408 = vmatpush2.bf16.msra.mxu0 %v1123
        %1409 = vmatprep.subr.bf16.mxu0 0
        %1410 = vmatpush2.bf16.msra.mxu0 %v1122
        %1411 = vmatprep.subr.bf16.mxu0 0
        %1412 = vmatpush2.bf16.msra.mxu0 %v1121
        %1413 = vmatprep.subr.bf16.mxu0 0
        %1414 = vmatpush2.bf16.msra.mxu0 %v1120
        %1415 = vmatprep.subr.bf16.mxu0 0
        %1416 = vmatpush2.bf16.msra.mxu0 %v1119
        %1417 = vmatprep.mubr.bf16.mxu0 %v748
        %1418 = vmatmul.mubr.bf16.gmra.mxu0 %v747
        %v1419 = vpop.f32.mrf.mxu0
        %v1420 = vadd.f32 %v1323, %v1419
        %v1421 = vpop.f32.mrf.mxu0
        %v1422 = vpop.f32.mrf.mxu0
        %v1423 = vadd.f32 %v1326, %v1422
        %v1424 = vpop.f32.mrf.mxu0
        %1425 = vmatprep.mubr.bf16.mxu0 %v755
        %1426 = vmatmul.mubr.bf16.gmra.mxu0 %v754
        %v1427 = vpop.f32.mrf.mxu0
        %v1428 = vadd.f32 %v1331, %v1427
        %v1429 = vpop.f32.mrf.mxu0
        %v1430 = vpop.f32.mrf.mxu0
        %v1431 = vadd.f32 %v1334, %v1430
        %v1432 = vpop.f32.mrf.mxu0
        %1433 = vmatprep.mubr.bf16.mxu0 %v762
        %1434 = vmatmul.mubr.bf16.gmra.mxu0 %v761
        %v1435 = vpop.f32.mrf.mxu0
        %v1436 = vadd.f32 %v1339, %v1435
        %v1437 = vpop.f32.mrf.mxu0
        %v1438 = vpop.f32.mrf.mxu0
        %v1439 = vadd.f32 %v1342, %v1438
        %v1440 = vpop.f32.mrf.mxu0
        %1441 = vmatprep.mubr.bf16.mxu0 %v769
        %1442 = vmatmul.mubr.bf16.gmra.mxu0 %v768
        %v1443 = vpop.f32.mrf.mxu0
        %v1444 = vadd.f32 %v1347, %v1443
        %v1445 = vpop.f32.mrf.mxu0
        %v1446 = vpop.f32.mrf.mxu0
        %v1447 = vadd.f32 %v1350, %v1446
        %v1448 = vpop.f32.mrf.mxu0
        %1449 = vmatprep.mubr.bf16.mxu0 %v776
        %1450 = vmatmul.mubr.bf16.gmra.mxu0 %v775
        %v1451 = vpop.f32.mrf.mxu0
        %v1452 = vadd.f32 %v1355, %v1451
        %v1453 = vpop.f32.mrf.mxu0
        %v1454 = vpop.f32.mrf.mxu0
        %v1455 = vadd.f32 %v1358, %v1454
        %v1456 = vpop.f32.mrf.mxu0
        %1457 = vmatprep.mubr.bf16.mxu0 %v783
        %1458 = vmatmul.mubr.bf16.gmra.mxu0 %v782
        %v1459 = vpop.f32.mrf.mxu0
        %v1460 = vadd.f32 %v1363, %v1459
        %v1461 = vpop.f32.mrf.mxu0
        %v1462 = vpop.f32.mrf.mxu0
        %v1463 = vadd.f32 %v1366, %v1462
        %v1464 = vpop.f32.mrf.mxu0
        %1465 = vmatprep.mubr.bf16.mxu0 %v790
        %1466 = vmatmul.mubr.bf16.gmra.mxu0 %v789
        %v1467 = vpop.f32.mrf.mxu0
        %v1468 = vadd.f32 %v1371, %v1467
        %v1469 = vpop.f32.mrf.mxu0
        %v1470 = vpop.f32.mrf.mxu0
        %v1471 = vadd.f32 %v1374, %v1470
        %v1472 = vpop.f32.mrf.mxu0
        %1473 = vmatprep.mubr.bf16.mxu0 %v797
        %1474 = vmatmul.mubr.bf16.gmra.mxu0 %v796
        %v1475 = vpop.f32.mrf.mxu0
        %v1476 = vadd.f32 %v1379, %v1475
        %v1477 = vpop.f32.mrf.mxu0
        %v1478 = vpop.f32.mrf.mxu0
        %v1479 = vadd.f32 %v1382, %v1478
        %v1480 = vpop.f32.mrf.mxu0
        %1481 = vdwg.mxu0
        %1482 = vmatprep.subr.bf16.mxu0 0
        %1483 = vmatpush1.bf16.msra.mxu0 %v1134
        %1484 = vmatprep.subr.bf16.mxu0 0
        %1485 = vmatpush1.bf16.msra.mxu0 %v1133
        %1486 = vmatprep.subr.bf16.mxu0 0
        %1487 = vmatpush1.bf16.msra.mxu0 %v1132
        %1488 = vmatprep.subr.bf16.mxu0 0
        %1489 = vmatpush1.bf16.msra.mxu0 %v1131
        %1490 = vmatprep.subr.bf16.mxu0 0
        %1491 = vmatpush1.bf16.msra.mxu0 %v1130
        %1492 = vmatprep.subr.bf16.mxu0 0
        %1493 = vmatpush1.bf16.msra.mxu0 %v1129
        %1494 = vmatprep.subr.bf16.mxu0 0
        %1495 = vmatpush1.bf16.msra.mxu0 %v1128
        %1496 = vmatprep.subr.bf16.mxu0 0
        %1497 = vmatpush1.bf16.msra.mxu0 %v1127
        %1498 = vmatprep.subr.bf16.mxu0 0
        %1499 = vmatpush2.bf16.msra.mxu0 0
        %1500 = vmatprep.subr.bf16.mxu0 0
        %1501 = vmatpush2.bf16.msra.mxu0 0
        %1502 = vmatprep.subr.bf16.mxu0 0
        %1503 = vmatpush2.bf16.msra.mxu0 0
        %1504 = vmatprep.subr.bf16.mxu0 0
        %1505 = vmatpush2.bf16.msra.mxu0 0
        %1506 = vmatprep.subr.bf16.mxu0 0
        %1507 = vmatpush2.bf16.msra.mxu0 0
        %1508 = vmatprep.subr.bf16.mxu0 0
        %1509 = vmatpush2.bf16.msra.mxu0 0
        %1510 = vmatprep.subr.bf16.mxu0 0
        %1511 = vmatpush2.bf16.msra.mxu0 0
        %1512 = vmatprep.subr.bf16.mxu0 0
        %1513 = vmatpush2.bf16.msra.mxu0 0
        %1514 = vmatprep.mubr.bf16.mxu0 0
        %1515 = vmatmul.mubr.bf16.gmra.mxu0 %v749
        %v1516 = vpop.f32.mrf.mxu0
        %v1517 = vadd.f32 %v1420, %v1516
        %v1518 = vpop.f32.mrf.mxu0
        %v1519 = vpop.f32.mrf.mxu0
        %v1520 = vadd.f32 %v1423, %v1519
        %v1521 = vpop.f32.mrf.mxu0
        %1522 = vmatprep.mubr.bf16.mxu0 0
        %1523 = vmatmul.mubr.bf16.gmra.mxu0 %v756
        %v1524 = vpop.f32.mrf.mxu0
        %v1525 = vadd.f32 %v1428, %v1524
        %v1526 = vpop.f32.mrf.mxu0
        %v1527 = vpop.f32.mrf.mxu0
        %v1528 = vadd.f32 %v1431, %v1527
        %v1529 = vpop.f32.mrf.mxu0
        %1530 = vmatprep.mubr.bf16.mxu0 0
        %1531 = vmatmul.mubr.bf16.gmra.mxu0 %v763
        %v1532 = vpop.f32.mrf.mxu0
        %v1533 = vadd.f32 %v1436, %v1532
        %v1534 = vpop.f32.mrf.mxu0
        %v1535 = vpop.f32.mrf.mxu0
        %v1536 = vadd.f32 %v1439, %v1535
        %v1537 = vpop.f32.mrf.mxu0
        %1538 = vmatprep.mubr.bf16.mxu0 0
        %1539 = vmatmul.mubr.bf16.gmra.mxu0 %v770
        %v1540 = vpop.f32.mrf.mxu0
        %v1541 = vadd.f32 %v1444, %v1540
        %v1542 = vpop.f32.mrf.mxu0
        %v1543 = vpop.f32.mrf.mxu0
        %v1544 = vadd.f32 %v1447, %v1543
        %v1545 = vpop.f32.mrf.mxu0
        %1546 = vmatprep.mubr.bf16.mxu0 0
        %1547 = vmatmul.mubr.bf16.gmra.mxu0 %v777
        %v1548 = vpop.f32.mrf.mxu0
        %v1549 = vadd.f32 %v1452, %v1548
        %v1550 = vpop.f32.mrf.mxu0
        %v1551 = vpop.f32.mrf.mxu0
        %v1552 = vadd.f32 %v1455, %v1551
        %v1553 = vpop.f32.mrf.mxu0
        %1554 = vmatprep.mubr.bf16.mxu0 0
        %1555 = vmatmul.mubr.bf16.gmra.mxu0 %v784
        %v1556 = vpop.f32.mrf.mxu0
        %v1557 = vadd.f32 %v1460, %v1556
        %v1558 = vpop.f32.mrf.mxu0
        %v1559 = vpop.f32.mrf.mxu0
        %v1560 = vadd.f32 %v1463, %v1559
        %v1561 = vpop.f32.mrf.mxu0
        %1562 = vmatprep.mubr.bf16.mxu0 0
        %1563 = vmatmul.mubr.bf16.gmra.mxu0 %v791
        %v1564 = vpop.f32.mrf.mxu0
        %v1565 = vadd.f32 %v1468, %v1564
        %v1566 = vpop.f32.mrf.mxu0
        %v1567 = vpop.f32.mrf.mxu0
        %v1568 = vadd.f32 %v1471, %v1567
        %v1569 = vpop.f32.mrf.mxu0
        %1570 = vmatprep.mubr.bf16.mxu0 0
        %1571 = vmatmul.mubr.bf16.gmra.mxu0 %v798
        %v1572 = vpop.f32.mrf.mxu0
        %v1573 = vadd.f32 %v1476, %v1572
        %v1574 = vpop.f32.mrf.mxu0
        %v1575 = vpop.f32.mrf.mxu0
        %v1576 = vadd.f32 %v1479, %v1575
        %v1577 = vpop.f32.mrf.mxu0
        %1578 = vdwg.mxu0
        %v1579 = vmax.f32 %v1517, 0.0
        %v1580 = vmax.f32 %v1520, 0.0
        %v1581 = vmax.f32 %v1525, 0.0
        %v1582 = vmax.f32 %v1528, 0.0
        %v1583 = vmax.f32 %v1533, 0.0
        %v1584 = vmax.f32 %v1536, 0.0
        %v1585 = vmax.f32 %v1541, 0.0
        %v1586 = vmax.f32 %v1544, 0.0
        %v1587 = vmax.f32 %v1549, 0.0
        %v1588 = vmax.f32 %v1552, 0.0
        %v1589 = vmax.f32 %v1557, 0.0
        %v1590 = vmax.f32 %v1560, 0.0
        %v1591 = vmax.f32 %v1565, 0.0
        %v1592 = vmax.f32 %v1568, 0.0
        %v1593 = vmax.f32 %v1573, 0.0
        %v1594 = vmax.f32 %v1576, 0.0
        %v1595 = vpack.c.bf16 %v1580, %v1579
        %v1596 = vpack.c.bf16 %v1582, %v1581
        %v1597 = vpack.c.bf16 %v1584, %v1583
        %v1598 = vpack.c.bf16 %v1586, %v1585
        %v1599 = vpack.c.bf16 %v1588, %v1587
        %v1600 = vpack.c.bf16 %v1590, %v1589
        %v1601 = vpack.c.bf16 %v1592, %v1591
        %v1602 = vpack.c.bf16 %v1594, %v1593
        %v1603 = vld [vmem:[#allocation7] sm:$0xff]
        %v1604 = vld [vmem:[#allocation7 + $0x8] sm:$0xff]
        %v1605 = vld [vmem:[#allocation7 + $0x10] sm:$0xff]
        %v1606 = vld [vmem:[#allocation7 + $0x18] sm:$0xff]
        %v1607 = vld [vmem:[#allocation7 + $0x20] sm:$0xff]
        %v1608 = vld [vmem:[#allocation7 + $0x28] sm:$0xff]
        %v1609 = vld [vmem:[#allocation7 + $0x30] sm:$0xff]
        %v1610 = vld [vmem:[#allocation7 + $0x38] sm:$0xff]
        %v1611 = vld [vmem:[#allocation7 + $0x40] sm:$0xff]
        %v1612 = vld [vmem:[#allocation7 + $0x48] sm:$0xff]
        %v1613 = vld [vmem:[#allocation7 + $0x50] sm:$0xff]
        %v1614 = vld [vmem:[#allocation7 + $0x58] sm:$0xff]
        %v1615 = vld [vmem:[#allocation7 + $0x60] sm:$0xff]
        %v1616 = vld [vmem:[#allocation7 + $0x68] sm:$0xff]
        %v1617 = vld [vmem:[#allocation7 + $0x70] sm:$0xff]
        %v1618 = vld [vmem:[#allocation7 + $0x78] sm:$0xff]
        %v1619 = vld [vmem:[%s4] sm:$0x3]
        %v1621 = vlaneseq
        %v1622 = vshrl.u32 %v1621, 7
        %v1623 = vsub.s32 0, %v1622
        %v1624 = vrot.slane %v1619, %v1623
        %v1625 = vlaneseq
        %v1626 = vshrl.u32 %v1625, 7
        %v1627 = vsub.s32 1, %v1626
        %v1628 = vrot.slane %v1619, %v1627
        %v1647 = vunpack.c.l.b16 %v1603
        %v1648 = vunpack.c.h.b16 %v1603
        %v1649 = vunpack.c.l.b16 %v1604
        %v1650 = vunpack.c.h.b16 %v1604
        %v1651 = vunpack.c.l.b16 %v1605
        %v1652 = vunpack.c.h.b16 %v1605
        %v1653 = vunpack.c.l.b16 %v1606
        %v1654 = vunpack.c.h.b16 %v1606
        %v1655 = vunpack.c.l.b16 %v1607
        %v1656 = vunpack.c.h.b16 %v1607
        %v1657 = vunpack.c.l.b16 %v1608
        %v1658 = vunpack.c.h.b16 %v1608
        %v1659 = vunpack.c.l.b16 %v1609
        %v1660 = vunpack.c.h.b16 %v1609
        %v1661 = vunpack.c.l.b16 %v1610
        %v1662 = vunpack.c.h.b16 %v1610
        %v1663 = vunpack.c.l.b16 %v1611
        %v1664 = vunpack.c.h.b16 %v1611
        %v1665 = vunpack.c.l.b16 %v1612
        %v1666 = vunpack.c.h.b16 %v1612
        %v1667 = vunpack.c.l.b16 %v1613
        %v1668 = vunpack.c.h.b16 %v1613
        %v1669 = vunpack.c.l.b16 %v1614
        %v1670 = vunpack.c.h.b16 %v1614
        %v1671 = vunpack.c.l.b16 %v1615
        %v1672 = vunpack.c.h.b16 %v1615
        %v1673 = vunpack.c.l.b16 %v1616
        %v1674 = vunpack.c.h.b16 %v1616
        %v1675 = vunpack.c.l.b16 %v1617
        %v1676 = vunpack.c.h.b16 %v1617
        %v1677 = vunpack.c.l.b16 %v1618
        %v1678 = vunpack.c.h.b16 %v1618
        %v1679 = vpack.c.b16 %v1649, %v1647
        %v1680 = vpack.c.b16 %v1650, %v1648
        %v1681 = vpack.c.b16 %v1653, %v1651
        %v1682 = vpack.c.b16 %v1654, %v1652
        %v1683 = vpack.c.b16 %v1657, %v1655
        %v1684 = vpack.c.b16 %v1658, %v1656
        %v1685 = vpack.c.b16 %v1661, %v1659
        %v1686 = vpack.c.b16 %v1662, %v1660
        %v1687 = vpack.c.b16 %v1665, %v1663
        %v1688 = vpack.c.b16 %v1666, %v1664
        %v1689 = vpack.c.b16 %v1669, %v1667
        %v1690 = vpack.c.b16 %v1670, %v1668
        %v1691 = vpack.c.b16 %v1673, %v1671
        %v1692 = vpack.c.b16 %v1674, %v1672
        %v1693 = vpack.c.b16 %v1677, %v1675
        %v1694 = vpack.c.b16 %v1678, %v1676
        %1711 = vmatprep.subr.bf16.mxu0 %v1694
        %1712 = vmatpush1.bf16.msra.mxu0 %v1693
        %1713 = vmatprep.subr.bf16.mxu0 %v1692
        %1714 = vmatpush1.bf16.msra.mxu0 %v1691
        %1715 = vmatprep.subr.bf16.mxu0 %v1690
        %1716 = vmatpush1.bf16.msra.mxu0 %v1689
        %1717 = vmatprep.subr.bf16.mxu0 %v1688
        %1718 = vmatpush1.bf16.msra.mxu0 %v1687
        %1719 = vmatprep.subr.bf16.mxu0 %v1686
        %1720 = vmatpush1.bf16.msra.mxu0 %v1685
        %1721 = vmatprep.subr.bf16.mxu0 %v1684
        %1722 = vmatpush1.bf16.msra.mxu0 %v1683
        %1723 = vmatprep.subr.bf16.mxu0 %v1682
        %1724 = vmatpush1.bf16.msra.mxu0 %v1681
        %1725 = vmatprep.subr.bf16.mxu0 %v1680
        %1726 = vmatpush1.bf16.msra.mxu0 %v1679
        %1727 = vmatprep.subr.bf16.mxu0 0
        %1728 = vmatpush2.bf16.msra.mxu0 0
        %1729 = vmatprep.subr.bf16.mxu0 0
        %1730 = vmatpush2.bf16.msra.mxu0 0
        %1731 = vmatprep.subr.bf16.mxu0 0
        %1732 = vmatpush2.bf16.msra.mxu0 0
        %1733 = vmatprep.subr.bf16.mxu0 0
        %1734 = vmatpush2.bf16.msra.mxu0 0
        %1735 = vmatprep.subr.bf16.mxu0 0
        %1736 = vmatpush2.bf16.msra.mxu0 0
        %1737 = vmatprep.subr.bf16.mxu0 0
        %1738 = vmatpush2.bf16.msra.mxu0 0
        %1739 = vmatprep.subr.bf16.mxu0 0
        %1740 = vmatpush2.bf16.msra.mxu0 0
        %1741 = vmatprep.subr.bf16.mxu0 0
        %1742 = vmatpush2.bf16.msra.mxu0 0
        %1743 = vmatprep.mubr.bf16.mxu0 0
        %1744 = vmatmul.mubr.bf16.gmra.mxu0 %v1595
        %v1745 = vpop.f32.mrf.mxu0
        %v1746 = vadd.f32 %v1624, %v1745
        %v1747 = vpop.f32.mrf.mxu0
        %v1748 = vadd.f32 %v1628, %v1747
        %v1749 = vpop.f32.mrf.mxu0
        %v1750 = vadd.f32 %v1624, %v1749
        %v1751 = vpop.f32.mrf.mxu0
        %v1752 = vadd.f32 %v1628, %v1751
        %1753 = vmatprep.mubr.bf16.mxu0 0
        %1754 = vmatmul.mubr.bf16.gmra.mxu0 %v1596
        %v1755 = vpop.f32.mrf.mxu0
        %v1756 = vadd.f32 %v1624, %v1755
        %v1757 = vpop.f32.mrf.mxu0
        %v1758 = vadd.f32 %v1628, %v1757
        %v1759 = vpop.f32.mrf.mxu0
        %v1760 = vadd.f32 %v1624, %v1759
        %v1761 = vpop.f32.mrf.mxu0
        %v1762 = vadd.f32 %v1628, %v1761
        %1763 = vmatprep.mubr.bf16.mxu0 0
        %1764 = vmatmul.mubr.bf16.gmra.mxu0 %v1597
        %v1765 = vpop.f32.mrf.mxu0
        %v1766 = vadd.f32 %v1624, %v1765
        %v1767 = vpop.f32.mrf.mxu0
        %v1768 = vadd.f32 %v1628, %v1767
        %v1769 = vpop.f32.mrf.mxu0
        %v1770 = vadd.f32 %v1624, %v1769
        %v1771 = vpop.f32.mrf.mxu0
        %v1772 = vadd.f32 %v1628, %v1771
        %1773 = vmatprep.mubr.bf16.mxu0 0
        %1774 = vmatmul.mubr.bf16.gmra.mxu0 %v1598
        %v1775 = vpop.f32.mrf.mxu0
        %v1776 = vadd.f32 %v1624, %v1775
        %v1777 = vpop.f32.mrf.mxu0
        %v1778 = vadd.f32 %v1628, %v1777
        %v1779 = vpop.f32.mrf.mxu0
        %v1780 = vadd.f32 %v1624, %v1779
        %v1781 = vpop.f32.mrf.mxu0
        %v1782 = vadd.f32 %v1628, %v1781
        %1783 = vmatprep.mubr.bf16.mxu0 0
        %1784 = vmatmul.mubr.bf16.gmra.mxu0 %v1599
        %v1785 = vpop.f32.mrf.mxu0
        %v1786 = vadd.f32 %v1624, %v1785
        %v1787 = vpop.f32.mrf.mxu0
        %v1788 = vadd.f32 %v1628, %v1787
        %v1789 = vpop.f32.mrf.mxu0
        %v1790 = vadd.f32 %v1624, %v1789
        %v1791 = vpop.f32.mrf.mxu0
        %v1792 = vadd.f32 %v1628, %v1791
        %1793 = vmatprep.mubr.bf16.mxu0 0
        %1794 = vmatmul.mubr.bf16.gmra.mxu0 %v1600
        %v1795 = vpop.f32.mrf.mxu0
        %v1796 = vadd.f32 %v1624, %v1795
        %v1797 = vpop.f32.mrf.mxu0
        %v1798 = vadd.f32 %v1628, %v1797
        %v1799 = vpop.f32.mrf.mxu0
        %v1800 = vadd.f32 %v1624, %v1799
        %v1801 = vpop.f32.mrf.mxu0
        %v1802 = vadd.f32 %v1628, %v1801
        %1803 = vmatprep.mubr.bf16.mxu0 0
        %1804 = vmatmul.mubr.bf16.gmra.mxu0 %v1601
        %v1805 = vpop.f32.mrf.mxu0
        %v1806 = vadd.f32 %v1624, %v1805
        %v1807 = vpop.f32.mrf.mxu0
        %v1808 = vadd.f32 %v1628, %v1807
        %v1809 = vpop.f32.mrf.mxu0
        %v1810 = vadd.f32 %v1624, %v1809
        %v1811 = vpop.f32.mrf.mxu0
        %v1812 = vadd.f32 %v1628, %v1811
        %1813 = vmatprep.mubr.bf16.mxu0 0
        %1814 = vmatmul.mubr.bf16.gmra.mxu0 %v1602
        %v1815 = vpop.f32.mrf.mxu0
        %v1816 = vadd.f32 %v1624, %v1815
        %v1817 = vpop.f32.mrf.mxu0
        %v1818 = vadd.f32 %v1628, %v1817
        %v1819 = vpop.f32.mrf.mxu0
        %v1820 = vadd.f32 %v1624, %v1819
        %v1821 = vpop.f32.mrf.mxu0
        %v1822 = vadd.f32 %v1628, %v1821
        %1823 = vdwg.mxu0
        %v1824 = vmax.f32 %v1746, 0.0
        %v1825 = vmax.f32 %v1748, 0.0
        %v1826 = vmax.f32 %v1750, 0.0
        %v1827 = vmax.f32 %v1752, 0.0
        %v1828 = vmax.f32 %v1756, 0.0
        %v1829 = vmax.f32 %v1758, 0.0
        %v1830 = vmax.f32 %v1760, 0.0
        %v1831 = vmax.f32 %v1762, 0.0
        %v1832 = vmax.f32 %v1766, 0.0
        %v1833 = vmax.f32 %v1768, 0.0
        %v1834 = vmax.f32 %v1770, 0.0
        %v1835 = vmax.f32 %v1772, 0.0
        %v1836 = vmax.f32 %v1776, 0.0
        %v1837 = vmax.f32 %v1778, 0.0
        %v1838 = vmax.f32 %v1780, 0.0
        %v1839 = vmax.f32 %v1782, 0.0
        %v1840 = vmax.f32 %v1786, 0.0
        %v1841 = vmax.f32 %v1788, 0.0
        %v1842 = vmax.f32 %v1790, 0.0
        %v1843 = vmax.f32 %v1792, 0.0
        %v1844 = vmax.f32 %v1796, 0.0
        %v1845 = vmax.f32 %v1798, 0.0
        %v1846 = vmax.f32 %v1800, 0.0
        %v1847 = vmax.f32 %v1802, 0.0
        %v1848 = vmax.f32 %v1806, 0.0
        %v1849 = vmax.f32 %v1808, 0.0
        %v1850 = vmax.f32 %v1810, 0.0
        %v1851 = vmax.f32 %v1812, 0.0
        %v1852 = vmax.f32 %v1816, 0.0
        %v1853 = vmax.f32 %v1818, 0.0
        %v1854 = vmax.f32 %v1820, 0.0
        %v1855 = vmax.f32 %v1822, 0.0
        %v1856 = vpack.c.bf16 %v1826, %v1824
        %v1857 = vpack.c.bf16 %v1827, %v1825
        %v1858 = vpack.c.bf16 %v1830, %v1828
        %v1859 = vpack.c.bf16 %v1831, %v1829
        %v1860 = vpack.c.bf16 %v1834, %v1832
        %v1861 = vpack.c.bf16 %v1835, %v1833
        %v1862 = vpack.c.bf16 %v1838, %v1836
        %v1863 = vpack.c.bf16 %v1839, %v1837
        %v1864 = vpack.c.bf16 %v1842, %v1840
        %v1865 = vpack.c.bf16 %v1843, %v1841
        %v1866 = vpack.c.bf16 %v1846, %v1844
        %v1867 = vpack.c.bf16 %v1847, %v1845
        %v1868 = vpack.c.bf16 %v1850, %v1848
        %v1869 = vpack.c.bf16 %v1851, %v1849
        %v1870 = vpack.c.bf16 %v1854, %v1852
        %v1871 = vpack.c.bf16 %v1855, %v1853
        %v1872 = vld [vmem:[#allocation8] sm:$0xf]
        %v1873 = vld [vmem:[#allocation8 + $0x4] sm:$0xf]
        %v1874 = vld [vmem:[#allocation8 + $0x8] sm:$0xf]
        %v1875 = vld [vmem:[#allocation8 + $0xc] sm:$0xf]
        %v1876 = vld [vmem:[#allocation8 + $0x10] sm:$0xf]
        %v1877 = vld [vmem:[#allocation8 + $0x14] sm:$0xf]
        %v1878 = vld [vmem:[#allocation8 + $0x18] sm:$0xf]
        %v1879 = vld [vmem:[#allocation8 + $0x1c] sm:$0xf]
        %v1880 = vld [vmem:[#allocation8 + $0x20] sm:$0xf]
        %v1881 = vld [vmem:[#allocation8 + $0x24] sm:$0xf]
        %v1882 = vld [vmem:[#allocation8 + $0x28] sm:$0xf]
        %v1883 = vld [vmem:[#allocation8 + $0x2c] sm:$0xf]
        %v1884 = vld [vmem:[#allocation8 + $0x30] sm:$0xf]
        %v1885 = vld [vmem:[#allocation8 + $0x34] sm:$0xf]
        %v1886 = vld [vmem:[#allocation8 + $0x38] sm:$0xf]
        %v1887 = vld [vmem:[#allocation8 + $0x3c] sm:$0xf]
        %v1888 = vld [vmem:[#allocation8 + $0x40] sm:$0xf]
        %v1889 = vld [vmem:[#allocation8 + $0x44] sm:$0xf]
        %v1890 = vld [vmem:[#allocation8 + $0x48] sm:$0xf]
        %v1891 = vld [vmem:[#allocation8 + $0x4c] sm:$0xf]
        %v1892 = vld [vmem:[#allocation8 + $0x50] sm:$0xf]
        %v1893 = vld [vmem:[#allocation8 + $0x54] sm:$0xf]
        %v1894 = vld [vmem:[#allocation8 + $0x58] sm:$0xf]
        %v1895 = vld [vmem:[#allocation8 + $0x5c] sm:$0xf]
        %v1896 = vld [vmem:[#allocation8 + $0x60] sm:$0xf]
        %v1897 = vld [vmem:[#allocation8 + $0x64] sm:$0xf]
        %v1898 = vld [vmem:[#allocation8 + $0x68] sm:$0xf]
        %v1899 = vld [vmem:[#allocation8 + $0x6c] sm:$0xf]
        %v1900 = vld [vmem:[#allocation8 + $0x70] sm:$0xf]
        %v1901 = vld [vmem:[#allocation8 + $0x74] sm:$0xf]
        %v1902 = vld [vmem:[#allocation8 + $0x78] sm:$0xf]
        %v1903 = vld [vmem:[#allocation8 + $0x7c] sm:$0xf]
        %v1904 = vld [vmem:[%s6] sm:$0x1]
        %v1906 = vlaneseq
        %v1907 = vshrl.u32 %v1906, 7
        %v1908 = vsub.s32 0, %v1907
        %v1909 = vrot.slane %v1904, %v1908
        %v1943 = vunpack.c.l.b16 %v1872
        %v1944 = vunpack.c.l.b16 %v1873
        %v1945 = vunpack.c.l.b16 %v1874
        %v1946 = vunpack.c.l.b16 %v1875
        %v1947 = vunpack.c.l.b16 %v1876
        %v1948 = vunpack.c.l.b16 %v1877
        %v1949 = vunpack.c.l.b16 %v1878
        %v1950 = vunpack.c.l.b16 %v1879
        %v1951 = vunpack.c.l.b16 %v1880
        %v1952 = vunpack.c.l.b16 %v1881
        %v1953 = vunpack.c.l.b16 %v1882
        %v1954 = vunpack.c.l.b16 %v1883
        %v1955 = vunpack.c.l.b16 %v1884
        %v1956 = vunpack.c.l.b16 %v1885
        %v1957 = vunpack.c.l.b16 %v1886
        %v1958 = vunpack.c.l.b16 %v1887
        %v1959 = vunpack.c.l.b16 %v1888
        %v1960 = vunpack.c.l.b16 %v1889
        %v1961 = vunpack.c.l.b16 %v1890
        %v1962 = vunpack.c.l.b16 %v1891
        %v1963 = vunpack.c.l.b16 %v1892
        %v1964 = vunpack.c.l.b16 %v1893
        %v1965 = vunpack.c.l.b16 %v1894
        %v1966 = vunpack.c.l.b16 %v1895
        %v1967 = vunpack.c.l.b16 %v1896
        %v1968 = vunpack.c.l.b16 %v1897
        %v1969 = vunpack.c.l.b16 %v1898
        %v1970 = vunpack.c.l.b16 %v1899
        %v1971 = vunpack.c.l.b16 %v1900
        %v1972 = vunpack.c.l.b16 %v1901
        %v1973 = vunpack.c.l.b16 %v1902
        %v1974 = vunpack.c.l.b16 %v1903
        %v1975 = vpack.c.b16 %v1944, %v1943
        %v1976 = vpack.c.b16 %v1946, %v1945
        %v1977 = vpack.c.b16 %v1948, %v1947
        %v1978 = vpack.c.b16 %v1950, %v1949
        %v1979 = vpack.c.b16 %v1952, %v1951
        %v1980 = vpack.c.b16 %v1954, %v1953
        %v1981 = vpack.c.b16 %v1956, %v1955
        %v1982 = vpack.c.b16 %v1958, %v1957
        %v1983 = vpack.c.b16 %v1960, %v1959
        %v1984 = vpack.c.b16 %v1962, %v1961
        %v1985 = vpack.c.b16 %v1964, %v1963
        %v1986 = vpack.c.b16 %v1966, %v1965
        %v1987 = vpack.c.b16 %v1968, %v1967
        %v1988 = vpack.c.b16 %v1970, %v1969
        %v1989 = vpack.c.b16 %v1972, %v1971
        %v1990 = vpack.c.b16 %v1974, %v1973
        %2007 = vmatprep.subr.bf16.mxu0 0
        %2008 = vmatpush1.bf16.msra.mxu0 %v1982
        %2009 = vmatprep.subr.bf16.mxu0 0
        %2010 = vmatpush1.bf16.msra.mxu0 %v1981
        %2011 = vmatprep.subr.bf16.mxu0 0
        %2012 = vmatpush1.bf16.msra.mxu0 %v1980
        %2013 = vmatprep.subr.bf16.mxu0 0
        %2014 = vmatpush1.bf16.msra.mxu0 %v1979
        %2015 = vmatprep.subr.bf16.mxu0 0
        %2016 = vmatpush1.bf16.msra.mxu0 %v1978
        %2017 = vmatprep.subr.bf16.mxu0 0
        %2018 = vmatpush1.bf16.msra.mxu0 %v1977
        %2019 = vmatprep.subr.bf16.mxu0 0
        %2020 = vmatpush1.bf16.msra.mxu0 %v1976
        %2021 = vmatprep.subr.bf16.mxu0 0
        %2022 = vmatpush1.bf16.msra.mxu0 %v1975
        %2023 = vmatprep.subr.bf16.mxu0 0
        %2024 = vmatpush2.bf16.msra.mxu0 %v1990
        %2025 = vmatprep.subr.bf16.mxu0 0
        %2026 = vmatpush2.bf16.msra.mxu0 %v1989
        %2027 = vmatprep.subr.bf16.mxu0 0
        %2028 = vmatpush2.bf16.msra.mxu0 %v1988
        %2029 = vmatprep.subr.bf16.mxu0 0
        %2030 = vmatpush2.bf16.msra.mxu0 %v1987
        %2031 = vmatprep.subr.bf16.mxu0 0
        %2032 = vmatpush2.bf16.msra.mxu0 %v1986
        %2033 = vmatprep.subr.bf16.mxu0 0
        %2034 = vmatpush2.bf16.msra.mxu0 %v1985
        %2035 = vmatprep.subr.bf16.mxu0 0
        %2036 = vmatpush2.bf16.msra.mxu0 %v1984
        %2037 = vmatprep.subr.bf16.mxu0 0
        %2038 = vmatpush2.bf16.msra.mxu0 %v1983
        %2039 = vmatprep.mubr.bf16.mxu0 %v1857
        %2040 = vmatmul.mubr.bf16.gmra.mxu0 %v1856
        %v2041 = vpop.f32.mrf.mxu0
        %v2042 = vadd.f32 %v1909, %v2041
        %v2043 = vpop.f32.mrf.mxu0
        %v2044 = vpop.f32.mrf.mxu0
        %v2045 = vadd.f32 %v1909, %v2044
        %v2046 = vpop.f32.mrf.mxu0
        %2047 = vmatprep.mubr.bf16.mxu0 %v1859
        %2048 = vmatmul.mubr.bf16.gmra.mxu0 %v1858
        %v2049 = vpop.f32.mrf.mxu0
        %v2050 = vadd.f32 %v1909, %v2049
        %v2051 = vpop.f32.mrf.mxu0
        %v2052 = vpop.f32.mrf.mxu0
        %v2053 = vadd.f32 %v1909, %v2052
        %v2054 = vpop.f32.mrf.mxu0
        %2055 = vmatprep.mubr.bf16.mxu0 %v1861
        %2056 = vmatmul.mubr.bf16.gmra.mxu0 %v1860
        %v2057 = vpop.f32.mrf.mxu0
        %v2058 = vadd.f32 %v1909, %v2057
        %v2059 = vpop.f32.mrf.mxu0
        %v2060 = vpop.f32.mrf.mxu0
        %v2061 = vadd.f32 %v1909, %v2060
        %v2062 = vpop.f32.mrf.mxu0
        %2063 = vmatprep.mubr.bf16.mxu0 %v1863
        %2064 = vmatmul.mubr.bf16.gmra.mxu0 %v1862
        %v2065 = vpop.f32.mrf.mxu0
        %v2066 = vadd.f32 %v1909, %v2065
        %v2067 = vpop.f32.mrf.mxu0
        %v2068 = vpop.f32.mrf.mxu0
        %v2069 = vadd.f32 %v1909, %v2068
        %v2070 = vpop.f32.mrf.mxu0
        %2071 = vmatprep.mubr.bf16.mxu0 %v1865
        %2072 = vmatmul.mubr.bf16.gmra.mxu0 %v1864
        %v2073 = vpop.f32.mrf.mxu0
        %v2074 = vadd.f32 %v1909, %v2073
        %v2075 = vpop.f32.mrf.mxu0
        %v2076 = vpop.f32.mrf.mxu0
        %v2077 = vadd.f32 %v1909, %v2076
        %v2078 = vpop.f32.mrf.mxu0
        %2079 = vmatprep.mubr.bf16.mxu0 %v1867
        %2080 = vmatmul.mubr.bf16.gmra.mxu0 %v1866
        %v2081 = vpop.f32.mrf.mxu0
        %v2082 = vadd.f32 %v1909, %v2081
        %v2083 = vpop.f32.mrf.mxu0
        %v2084 = vpop.f32.mrf.mxu0
        %v2085 = vadd.f32 %v1909, %v2084
        %v2086 = vpop.f32.mrf.mxu0
        %2087 = vmatprep.mubr.bf16.mxu0 %v1869
        %2088 = vmatmul.mubr.bf16.gmra.mxu0 %v1868
        %v2089 = vpop.f32.mrf.mxu0
        %v2090 = vadd.f32 %v1909, %v2089
        %v2091 = vpop.f32.mrf.mxu0
        %v2092 = vpop.f32.mrf.mxu0
        %v2093 = vadd.f32 %v1909, %v2092
        %v2094 = vpop.f32.mrf.mxu0
        %2095 = vmatprep.mubr.bf16.mxu0 %v1871
        %2096 = vmatmul.mubr.bf16.gmra.mxu0 %v1870
        %v2097 = vpop.f32.mrf.mxu0
        %v2098 = vadd.f32 %v1909, %v2097
        %v2099 = vpop.f32.mrf.mxu0
        %v2100 = vpop.f32.mrf.mxu0
        %v2101 = vadd.f32 %v1909, %v2100
        %v2102 = vpop.f32.mrf.mxu0
        %2103 = vdwg.mxu0
        %2104 = vst [vmem:[%s372] sm:$0xff] %v2042
        %2105 = vst [vmem:[%s372 + $0x8] sm:$0xff] %v2045
        %2106 = vst [vmem:[%s372 + $0x10] sm:$0xff] %v2050
        %2107 = vst [vmem:[%s372 + $0x18] sm:$0xff] %v2053
        %2108 = vst [vmem:[%s372 + $0x20] sm:$0xff] %v2058
        %2109 = vst [vmem:[%s372 + $0x28] sm:$0xff] %v2061
        %2110 = vst [vmem:[%s372 + $0x30] sm:$0xff] %v2066
        %2111 = vst [vmem:[%s372 + $0x38] sm:$0xff] %v2069
        %2112 = vst [vmem:[%s372 + $0x40] sm:$0xff] %v2074
        %2113 = vst [vmem:[%s372 + $0x48] sm:$0xff] %v2077
        %2114 = vst [vmem:[%s372 + $0x50] sm:$0xff] %v2082
        %2115 = vst [vmem:[%s372 + $0x58] sm:$0xff] %v2085
        %2116 = vst [vmem:[%s372 + $0x60] sm:$0xff] %v2090
        %2117 = vst [vmem:[%s372 + $0x68] sm:$0xff] %v2093
        %2118 = vst [vmem:[%s372 + $0x70] sm:$0xff] %v2098
        %2119 = vst [vmem:[%s372 + $0x78] sm:$0xff] %v2101
        %2120 = vmax.xlane.f32.xlu0 %v2042
        %v2121 = vpop.xlane.xlu0 %2120
        %2122 = vmax.xlane.f32.xlu0 %v2045
        %v2123 = vpop.xlane.xlu0 %2122
        %2124 = vmax.xlane.f32.xlu0 %v2050
        %v2125 = vpop.xlane.xlu0 %2124
        %2126 = vmax.xlane.f32.xlu0 %v2053
        %v2127 = vpop.xlane.xlu0 %2126
        %2128 = vmax.xlane.f32.xlu0 %v2058
        %v2129 = vpop.xlane.xlu0 %2128
        %2130 = vmax.xlane.f32.xlu0 %v2061
        %v2131 = vpop.xlane.xlu0 %2130
        %2132 = vmax.xlane.f32.xlu0 %v2066
        %v2133 = vpop.xlane.xlu0 %2132
        %2134 = vmax.xlane.f32.xlu0 %v2069
        %v2135 = vpop.xlane.xlu0 %2134
        %2136 = vmax.xlane.f32.xlu0 %v2074
        %v2137 = vpop.xlane.xlu0 %2136
        %2138 = vmax.xlane.f32.xlu0 %v2077
        %v2139 = vpop.xlane.xlu0 %2138
        %2140 = vmax.xlane.f32.xlu0 %v2082
        %v2141 = vpop.xlane.xlu0 %2140
        %2142 = vmax.xlane.f32.xlu0 %v2085
        %v2143 = vpop.xlane.xlu0 %2142
        %2144 = vmax.xlane.f32.xlu0 %v2090
        %v2145 = vpop.xlane.xlu0 %2144
        %2146 = vmax.xlane.f32.xlu0 %v2093
        %v2147 = vpop.xlane.xlu0 %2146
        %2148 = vmax.xlane.f32.xlu0 %v2098
        %v2149 = vpop.xlane.xlu0 %2148
        %2150 = vmax.xlane.f32.xlu0 %v2101
        %v2151 = vpop.xlane.xlu0 %2150
        %v2152 = vsub.f32 %v2042, %v2121
        %v2153 = vsub.f32 %v2045, %v2123
        %v2154 = vsub.f32 %v2050, %v2125
        %v2155 = vsub.f32 %v2053, %v2127
        %v2156 = vsub.f32 %v2058, %v2129
        %v2157 = vsub.f32 %v2061, %v2131
        %v2158 = vsub.f32 %v2066, %v2133
        %v2159 = vsub.f32 %v2069, %v2135
        %v2160 = vsub.f32 %v2074, %v2137
        %v2161 = vsub.f32 %v2077, %v2139
        %v2162 = vsub.f32 %v2082, %v2141
        %v2163 = vsub.f32 %v2085, %v2143
        %v2164 = vsub.f32 %v2090, %v2145
        %v2165 = vsub.f32 %v2093, %v2147
        %v2166 = vsub.f32 %v2098, %v2149
        %v2167 = vsub.f32 %v2101, %v2151
        %v2168 = vmul.f32 %v2152, 1.442695
        %v2169 = vpow.pop %v2168
        %v2170 = vmul.f32 %v2153, 1.442695
        %v2171 = vpow.pop %v2170
        %v2172 = vmul.f32 %v2154, 1.442695
        %v2173 = vpow.pop %v2172
        %v2174 = vmul.f32 %v2155, 1.442695
        %v2175 = vpow.pop %v2174
        %v2176 = vmul.f32 %v2156, 1.442695
        %v2177 = vpow.pop %v2176
        %v2178 = vmul.f32 %v2157, 1.442695
        %v2179 = vpow.pop %v2178
        %v2180 = vmul.f32 %v2158, 1.442695
        %v2181 = vpow.pop %v2180
        %v2182 = vmul.f32 %v2159, 1.442695
        %v2183 = vpow.pop %v2182
        %v2184 = vmul.f32 %v2160, 1.442695
        %v2185 = vpow.pop %v2184
        %v2186 = vmul.f32 %v2161, 1.442695
        %v2187 = vpow.pop %v2186
        %v2188 = vmul.f32 %v2162, 1.442695
        %v2189 = vpow.pop %v2188
        %v2190 = vmul.f32 %v2163, 1.442695
        %v2191 = vpow.pop %v2190
        %v2192 = vmul.f32 %v2164, 1.442695
        %v2193 = vpow.pop %v2192
        %v2194 = vmul.f32 %v2165, 1.442695
        %v2195 = vpow.pop %v2194
        %v2196 = vmul.f32 %v2166, 1.442695
        %v2197 = vpow.pop %v2196
        %v2198 = vmul.f32 %v2167, 1.442695
        %v2199 = vpow.pop %v2198
        %2200 = vadd.xlane.f32.xlu0 %v2169
        %v2201 = vpop.xlane.xlu0 %2200
        %2202 = vadd.xlane.f32.xlu0 %v2171
        %v2203 = vpop.xlane.xlu0 %2202
        %2204 = vadd.xlane.f32.xlu0 %v2173
        %v2205 = vpop.xlane.xlu0 %2204
        %2206 = vadd.xlane.f32.xlu0 %v2175
        %v2207 = vpop.xlane.xlu0 %2206
        %2208 = vadd.xlane.f32.xlu0 %v2177
        %v2209 = vpop.xlane.xlu0 %2208
        %2210 = vadd.xlane.f32.xlu0 %v2179
        %v2211 = vpop.xlane.xlu0 %2210
        %2212 = vadd.xlane.f32.xlu0 %v2181
        %v2213 = vpop.xlane.xlu0 %2212
        %2214 = vadd.xlane.f32.xlu0 %v2183
        %v2215 = vpop.xlane.xlu0 %2214
        %2216 = vadd.xlane.f32.xlu0 %v2185
        %v2217 = vpop.xlane.xlu0 %2216
        %2218 = vadd.xlane.f32.xlu0 %v2187
        %v2219 = vpop.xlane.xlu0 %2218
        %2220 = vadd.xlane.f32.xlu0 %v2189
        %v2221 = vpop.xlane.xlu0 %2220
        %2222 = vadd.xlane.f32.xlu0 %v2191
        %v2223 = vpop.xlane.xlu0 %2222
        %2224 = vadd.xlane.f32.xlu0 %v2193
        %v2225 = vpop.xlane.xlu0 %2224
        %2226 = vadd.xlane.f32.xlu0 %v2195
        %v2227 = vpop.xlane.xlu0 %2226
        %2228 = vadd.xlane.f32.xlu0 %v2197
        %v2229 = vpop.xlane.xlu0 %2228
        %2230 = vadd.xlane.f32.xlu0 %v2199
        %v2231 = vpop.xlane.xlu0 %2230
        %v2232 = vlog2.pop %v2201
        %v2233 = vmul.f32 %v2232, 0.6931472
        %v2234 = vlog2.pop %v2203
        %v2235 = vmul.f32 %v2234, 0.6931472
        %v2236 = vlog2.pop %v2205
        %v2237 = vmul.f32 %v2236, 0.6931472
        %v2238 = vlog2.pop %v2207
        %v2239 = vmul.f32 %v2238, 0.6931472
        %v2240 = vlog2.pop %v2209
        %v2241 = vmul.f32 %v2240, 0.6931472
        %v2242 = vlog2.pop %v2211
        %v2243 = vmul.f32 %v2242, 0.6931472
        %v2244 = vlog2.pop %v2213
        %v2245 = vmul.f32 %v2244, 0.6931472
        %v2246 = vlog2.pop %v2215
        %v2247 = vmul.f32 %v2246, 0.6931472
        %v2248 = vlog2.pop %v2217
        %v2249 = vmul.f32 %v2248, 0.6931472
        %v2250 = vlog2.pop %v2219
        %v2251 = vmul.f32 %v2250, 0.6931472
        %v2252 = vlog2.pop %v2221
        %v2253 = vmul.f32 %v2252, 0.6931472
        %v2254 = vlog2.pop %v2223
        %v2255 = vmul.f32 %v2254, 0.6931472
        %v2256 = vlog2.pop %v2225
        %v2257 = vmul.f32 %v2256, 0.6931472
        %v2258 = vlog2.pop %v2227
        %v2259 = vmul.f32 %v2258, 0.6931472
        %v2260 = vlog2.pop %v2229
        %v2261 = vmul.f32 %v2260, 0.6931472
        %v2262 = vlog2.pop %v2231
        %v2263 = vmul.f32 %v2262, 0.6931472
        %v2264 = vsub.f32 %v2152, %v2233
        %v2265 = vsub.f32 %v2153, %v2235
        %v2266 = vsub.f32 %v2154, %v2237
        %v2267 = vsub.f32 %v2155, %v2239
        %v2268 = vsub.f32 %v2156, %v2241
        %v2269 = vsub.f32 %v2157, %v2243
        %v2270 = vsub.f32 %v2158, %v2245
        %v2271 = vsub.f32 %v2159, %v2247
        %v2272 = vsub.f32 %v2160, %v2249
        %v2273 = vsub.f32 %v2161, %v2251
        %v2274 = vsub.f32 %v2162, %v2253
        %v2275 = vsub.f32 %v2163, %v2255
        %v2276 = vsub.f32 %v2164, %v2257
        %v2277 = vsub.f32 %v2165, %v2259
        %v2278 = vsub.f32 %v2166, %v2261
        %v2279 = vsub.f32 %v2167, %v2263
        %2280 = vst [vmem:[%s379] sm:$0xff] %v2264
        %2281 = vst [vmem:[%s379 + $0x8] sm:$0xff] %v2265
        %2282 = vst [vmem:[%s379 + $0x10] sm:$0xff] %v2266
        %2283 = vst [vmem:[%s379 + $0x18] sm:$0xff] %v2267
        %2284 = vst [vmem:[%s379 + $0x20] sm:$0xff] %v2268
        %2285 = vst [vmem:[%s379 + $0x28] sm:$0xff] %v2269
        %2286 = vst [vmem:[%s379 + $0x30] sm:$0xff] %v2270
        %2287 = vst [vmem:[%s379 + $0x38] sm:$0xff] %v2271
        %2288 = vst [vmem:[%s379 + $0x40] sm:$0xff] %v2272
        %2289 = vst [vmem:[%s379 + $0x48] sm:$0xff] %v2273
        %2290 = vst [vmem:[%s379 + $0x50] sm:$0xff] %v2274
        %2291 = vst [vmem:[%s379 + $0x58] sm:$0xff] %v2275
        %2292 = vst [vmem:[%s379 + $0x60] sm:$0xff] %v2276
        %2293 = vst [vmem:[%s379 + $0x68] sm:$0xff] %v2277
        %2294 = vst [vmem:[%s379 + $0x70] sm:$0xff] %v2278
        %2295 = vst [vmem:[%s379 + $0x78] sm:$0xff] %v2279
        %s2296 = sand.u32 %s191, 1
        %s2297 = scalar_lea.sflag [#allocation4], %s2296
        %s2298 = sand.u32 %s191, 1
        %s2299 = smul.addr %s2298, 128
        %s2300 = scalar_lea.vmem [#allocation10], %s2299
        %s2301 = sand.u32 %s217, 1
        %s2302 = scalar_lea.sflag [#allocation12], %s2301
        %s2303 = sand.u32 %s217, 1
        %s2304 = smul.addr %s2303, 128
        %s2305 = scalar_lea.vmem [#allocation11], %s2304
        // Predicated region
        $region65: #{tpu_custom_call.1} parent=47 // pred_check
          %p2306 = pneg %p201
        $region66: #{tpu_custom_call.1} parent=47 // pred_check_branch
          %2308 = sbr.rel (%p2306) target = $region68
        $region67: #{tpu_custom_call.1} parent=47 // pred_region
          %s2309 = smul.u32 16, %s31
          %s2311 = ssub.s32 2048, 2048
          %2312 = vsyncadd %s2297, %s2311
          %s2313 = smul.addr %s2309, 128
          %s2314 = scalar_lea.hbm %s7, %s2313
          %s2315 = sshll.u32 %s2300, 4
          %s2316 = int_to_ptr.vmem [resolvable:$true] %s2315
          %2321 = dma.vmem_to_hbm [thread:$0]  %s2316, 2048, %s2314, %s2297, 128, 128, 8
        $region68: #{tpu_custom_call.1} parent=47 // pred_fallthru
          _
        // Predicated region
        $region69: #{tpu_custom_call.1} parent=47 // pred_check
          %p2322 = pneg %p227
        $region70: #{tpu_custom_call.1} parent=47 // pred_check_branch
          %2324 = sbr.rel (%p2322) target = $region72
        $region71: #{tpu_custom_call.1} parent=47 // pred_region
          %s2325 = smul.u32 16, %s31
          %s2327 = ssub.s32 2048, 2048
          %2328 = vsyncadd %s2302, %s2327
          %s2329 = smul.addr %s2325, 128
          %s2330 = scalar_lea.hbm %s8, %s2329
          %s2331 = sshll.u32 %s2305, 4
          %s2332 = int_to_ptr.vmem [resolvable:$true] %s2331
          %2337 = dma.vmem_to_hbm [thread:$0]  %s2332, 2048, %s2330, %s2302, 128, 128, 8
        $region72: #{tpu_custom_call.1} parent=47 // pred_fallthru
          _
      $region48: #{tpu_custom_call.1} parent=5 // pred_fallthru
        _
      %p2338 = scmp.le.s32.totalorder 2, %s26
      // Predicated region
      $region73: #{tpu_custom_call.1} parent=5 // pred_check
        %p2339 = pneg %p2338
      $region74: #{tpu_custom_call.1} parent=5 // pred_check_branch
        %2341 = sbr.rel (%p2339) target = $region76
      $region75: #{tpu_custom_call.1} parent=5 // pred_region
        %s2342 = ssub.s32 %s26, 2
        // Predicated region
        $region77: #{tpu_custom_call.1} parent=75 // pred_check
          %p2343 = pneg %p207
        $region78: #{tpu_custom_call.1} parent=75 // pred_check_branch
          %2345 = sbr.rel (%p2343) target = $region80
        $region79: #{tpu_custom_call.1} parent=75 // pred_region
          %s2346 = sand.u32 %s192, 1
          %s2347 = scalar_lea.sflag [#allocation4], %s2346
          %s2348 = sand.u32 %s192, 1
          %s2349 = smul.addr %s2348, 128
          %s2350 = scalar_lea.vmem [#allocation10], %s2349
          %2351 = dma.done %s2347, 2048
        $region80: #{tpu_custom_call.1} parent=75 // pred_fallthru
          _
        // Predicated region
        $region81: #{tpu_custom_call.1} parent=75 // pred_check
          %p2352 = pneg %p233
        $region82: #{tpu_custom_call.1} parent=75 // pred_check_branch
          %2354 = sbr.rel (%p2352) target = $region84
        $region83: #{tpu_custom_call.1} parent=75 // pred_region
          %s2355 = sand.u32 %s218, 1
          %s2356 = scalar_lea.sflag [#allocation12], %s2355
          %s2357 = sand.u32 %s218, 1
          %s2358 = smul.addr %s2357, 128
          %s2359 = scalar_lea.vmem [#allocation11], %s2358
          %2360 = dma.done %s2356, 2048
        $region84: #{tpu_custom_call.1} parent=75 // pred_fallthru
          _
      $region76: #{tpu_custom_call.1} parent=5 // pred_fallthru
        _
    $region6: #{tpu_custom_call.1} parent=1 // loop_footer
      %s30 = sadd.s32 1, %s26
    $region7: #{tpu_custom_call.1} parent=1 // loop_footer_branch
      %25 = sbr.rel target = $region3
    $region8: #{tpu_custom_call.1} parent=1 // loop_exit
      _
    %2361 = vsyncpa [#allocation3], 1
    %s2362 = scalar_lea.sflag [#allocation3], 1
    %2363 = vsyncpa %s2362, 1
    %2364 = vsyncpa [#allocation6], 1
    %2365 = vsyncpa [#allocation9], 1
    %2366 = vsyncpa [#allocation4], 1
    %s2367 = scalar_lea.sflag [#allocation4], 1
    %2368 = vsyncpa %s2367, 1
    %2369 = vsyncpa [#allocation12], 1
    %s2370 = scalar_lea.sflag [#allocation12], 1
    %2371 = vsyncpa %s2370, 1

</llo_original>
